<compile_context>
chip_gen: v5e
topology: v5e:2x2
jax: 0.10.0
libtpu: 0.0.40
codegen_flags: <defaults>
</compile_context>

<pallas_src>
import math

import jax
import jax.numpy as jnp
from jax.experimental import pallas as pl
from jax.experimental.pallas import tpu as pltpu


def _lora_linear_kernel(x_ref, wt_ref, b_ref, a_ref, bs_ref, o_ref,
                        acc_ref, xa_ref):
    """One (i, j, k) grid step.

    x_ref : (tm, tk)   activation tile
    wt_ref: (tk, tn)   pre-transposed weight tile (W^T)
    b_ref : (1,  tn)   bias tile (f32)
    a_ref : (tk, R)    LoRA A tile
    bs_ref: (R,  tn)   alpha-scaled LoRA B tile
    o_ref : (tm, tn)   output tile
    acc_ref: (tm, tn)  f32 scratch accumulator for the base matmul
    xa_ref : (tm, R)   f32 scratch accumulator for x @ A
    """
    k = pl.program_id(2)

    @pl.when(k == 0)
    def _init():
        acc_ref[...] = jnp.zeros_like(acc_ref)
        xa_ref[...] = jnp.zeros_like(xa_ref)

    x = x_ref[...]
    # Base linear contraction over this K tile (MXU, f32 accumulation).
    acc_ref[...] += jnp.dot(x, wt_ref[...], preferred_element_type=jnp.float32)
    # LoRA first stage: tiny (tm, R) accumulator, negligible vs the base matmul.
    xa_ref[...] += jnp.dot(x, a_ref[...], preferred_element_type=jnp.float32)

    @pl.when(k == pl.num_programs(2) - 1)
    def _epilogue():
        # (tm, R) @ (R, tn); alpha is already folded into B_scaled.
        lora = jnp.dot(xa_ref[...], bs_ref[...].astype(jnp.float32),
                       preferred_element_type=jnp.float32)
        out = acc_ref[...] + b_ref[...].astype(jnp.float32) + lora
        o_ref[...] = out.astype(o_ref.dtype)


def _pick_tile(dim, target, align):
    """Largest legal block along `dim`: either the full extent (always legal)
    or a divisor of `dim` that is a multiple of `align` and <= `target`."""
    if dim <= target:
        return dim
    t = (target // align) * align
    while t >= align:
        if dim % t == 0:
            return t
        t -= align
    return dim  # fall back to a full-extent block


def prepare_params(W, b, B, alpha):
    """One-time, outside-the-hot-path parameter prep.

    W: [N, K] -> Wt [K, N]; b: [N] -> [1, N] f32; B: [R, N] -> alpha * B.
    """
    Wt = jnp.transpose(W)
    b2 = jnp.reshape(b, (1, -1)).astype(jnp.float32)
    B_scaled = jnp.asarray(alpha, B.dtype) * B
    return Wt, b2, B_scaled


def linear_with_lora(x, Wt, b2, A, B_scaled, *, tm=128, tn=256, tk=256):
    """Fused LinearWithLoRA forward.

    x: [M, K], Wt: [K, N] (pre-transposed W), b2: [1, N] f32,
    A: [K, R], B_scaled: [R, N] (already scaled by alpha)  ->  [M, N].
    """
    M, K = x.shape
    Kw, N = Wt.shape
    assert Kw == K and A.shape[0] == K and B_scaled.shape[1] == N
    R = A.shape[1]

    tm = _pick_tile(M, tm, 8)
    tn = _pick_tile(N, tn, 128)
    tk = _pick_tile(K, tk, 128)
    grid = (M // tm, N // tn, K // tk)

    flops = 2 * M * N * K + 2 * M * K * R + 2 * M * R * N
    bytes_accessed = (x.size * x.dtype.itemsize + Wt.size * Wt.dtype.itemsize
                      + b2.size * 4 + A.size * A.dtype.itemsize
                      + B_scaled.size * B_scaled.dtype.itemsize
                      + M * N * x.dtype.itemsize)

    return pl.pallas_call(
        _lora_linear_kernel,
        out_shape=jax.ShapeDtypeStruct((M, N), x.dtype),
        grid_spec=pltpu.PrefetchScalarGridSpec(
            num_scalar_prefetch=0,
            grid=grid,
            in_specs=[
                pl.BlockSpec((tm, tk), lambda i, j, k: (i, k)),   # x
                pl.BlockSpec((tk, tn), lambda i, j, k: (k, j)),   # Wt
                pl.BlockSpec((1, tn), lambda i, j, k: (0, j)),    # bias (k-invariant)
                pl.BlockSpec((tk, R), lambda i, j, k: (k, 0)),    # A
                pl.BlockSpec((R, tn), lambda i, j, k: (0, j)),    # alpha*B (k-invariant)
            ],
            out_specs=pl.BlockSpec((tm, tn), lambda i, j, k: (i, j)),
            scratch_shapes=[
                pltpu.VMEM((tm, tn), jnp.float32),  # base-matmul accumulator
                pltpu.VMEM((tm, R), jnp.float32),   # x@A accumulator
            ],
        ),
        compiler_params=pltpu.CompilerParams(
            dimension_semantics=("parallel", "parallel", "arbitrary"),
        ),
        cost_estimate=pl.CostEstimate(flops=flops, transcendentals=0,
                                      bytes_accessed=bytes_accessed),
    )(x, Wt, b2, A, B_scaled)


def reference(x, W, b, A, B, alpha):
    hi = jax.lax.Precision.HIGHEST
    base = jnp.dot(x, W.T, precision=hi) + b
    lora = alpha * jnp.dot(jnp.dot(x, A, precision=hi), B, precision=hi)
    return base + lora


if __name__ == "__main__":
    # Shapes consistent with Linear(in_features=512, out_features=512) + LoRA(rank=8).
    # Tile-aligned (multiples of 128) so output stores are lane-dense and the
    # (i, j, k) grid is actually exercised (grid = (1, 2, 2)).
    batch, in_dim, out_dim, rank = 128, 512, 512, 8
    alpha = 2.0

    key = jax.random.PRNGKey(0)
    kx, kw, kb, ka, kbb = jax.random.split(key, 5)

    x = jax.random.normal(kx, (batch, in_dim), dtype=jnp.float32)

    # torch.nn.Linear default init: U(-1/sqrt(in), 1/sqrt(in)) for W and bias.
    bound_w = 1.0 / math.sqrt(in_dim)
    W = jax.random.uniform(kw, (out_dim, in_dim), minval=-bound_w, maxval=bound_w,
                           dtype=jnp.float32)
    b = jax.random.uniform(kb, (out_dim,), minval=-bound_w, maxval=bound_w,
                           dtype=jnp.float32)

    # LoRA A: kaiming_uniform_(a=sqrt(5)) on shape (in_dim, rank).
    gain = math.sqrt(2.0 / (1.0 + 5.0))
    bound_a = gain * math.sqrt(3.0 / rank)
    A = jax.random.uniform(ka, (in_dim, rank), minval=-bound_a, maxval=bound_a,
                           dtype=jnp.float32)
    # The module initializes B to zeros; use a NONZERO B in the test so the
    # alpha*(x@A@B) path is actually validated numerically.
    B = 0.05 * jax.random.normal(kbb, (rank, out_dim), dtype=jnp.float32)

    # One-time parameter prep (outside the hot path): transpose W, fold alpha.
    Wt, b2, Bs = prepare_params(W, b, B, alpha)

    # --- f32 run ---
    out = linear_with_lora(x, Wt, b2, A, Bs)
    out = jax.block_until_ready(out)
    ref = reference(x, W, b, A, B, alpha)
    assert out.shape == (batch, out_dim)
    assert jnp.allclose(out, ref, atol=1e-3, rtol=1e-3), "f32 mismatch vs reference"

    # --- bf16 run (bf16-native MXU, f32 accumulation) ---
    x_bf = x.astype(jnp.bfloat16)
    out_bf = linear_with_lora(x_bf, Wt.astype(jnp.bfloat16), b2,
                              A.astype(jnp.bfloat16), Bs.astype(jnp.bfloat16))
    out_bf = jax.block_until_ready(out_bf)
    assert out_bf.shape == (batch, out_dim)
    assert jnp.allclose(out_bf.astype(jnp.float32), ref, atol=5e-2, rtol=5e-2), \
        "bf16 mismatch vs reference"

    print("KERNEL_OK")
</pallas_src>

<mosaic_0001>
module attributes {stable_mosaic.version = 11 : i64} {
  func.func @_lora_linear_kernel(%arg0: i32, %arg1: i32, %arg2: i32, %arg3: memref<128x256xf32, #tpu.memory_space<vmem>>, %arg4: memref<256x256xf32, #tpu.memory_space<vmem>>, %arg5: memref<1x256xf32, #tpu.memory_space<vmem>>, %arg6: memref<256x8xf32, #tpu.memory_space<vmem>>, %arg7: memref<8x256xf32, #tpu.memory_space<vmem>>, %arg8: memref<128x256xf32, #tpu.memory_space<vmem>>, %arg9: memref<128x256xf32, #tpu.memory_space<vmem>>, %arg10: memref<128x8xf32, #tpu.memory_space<vmem>>) attributes {dimension_semantics = [#tpu.dimension_semantics<parallel>, #tpu.dimension_semantics<parallel>, #tpu.dimension_semantics<arbitrary>], iteration_bounds = array<i64: 1, 2, 2>, scalar_prefetch = 0 : i64, scratch_operands = 2 : i64, tpu.core_type = #tpu.core_type<tc>, window_params = [{transform_indices = @transform_0, window_bounds = array<i64: 128, 256>}, {transform_indices = @transform_1, window_bounds = array<i64: 256, 256>}, {transform_indices = @transform_2, window_bounds = array<i64: 1, 256>}, {transform_indices = @transform_3, window_bounds = array<i64: 256, 8>}, {transform_indices = @transform_4, window_bounds = array<i64: 8, 256>}, {transform_indices = @transform_5, window_bounds = array<i64: 128, 256>}]} {
    %c0_i32 = arith.constant 0 : i32
    %0 = arith.cmpi eq, %arg2, %c0_i32 : i32
    %1 = arith.extui %0 : i1 to i32
    %c0_i32_0 = arith.constant 0 : i32
    %2 = arith.cmpi ne, %1, %c0_i32_0 : i32
    scf.if %2 {
      %cst_16 = arith.constant 0.000000e+00 : f32
      %17 = vector.broadcast %cst_16 : f32 to vector<128x256xf32>
      %c0_17 = arith.constant 0 : index
      %c0_18 = arith.constant 0 : index
      %18 = vector.load %arg9[%c0_17, %c0_18] : memref<128x256xf32, #tpu.memory_space<vmem>>, vector<128x256xf32>
      tpu.vector_store %arg9[%c0_17, %c0_18], %17 {strides = array<i32>} : memref<128x256xf32, #tpu.memory_space<vmem>>, vector<128x256xf32>,
      %cst_19 = arith.constant 0.000000e+00 : f32
      %19 = vector.broadcast %cst_19 : f32 to vector<128x8xf32>
      %c0_20 = arith.constant 0 : index
      %c0_21 = arith.constant 0 : index
      %20 = vector.load %arg10[%c0_20, %c0_21] : memref<128x8xf32, #tpu.memory_space<vmem>>, vector<128x8xf32>
      tpu.vector_store %arg10[%c0_20, %c0_21], %19 {strides = array<i32>} : memref<128x8xf32, #tpu.memory_space<vmem>>, vector<128x8xf32>,
    } else {
    }
    %c0 = arith.constant 0 : index
    %c0_1 = arith.constant 0 : index
    %3 = vector.load %arg3[%c0, %c0_1] : memref<128x256xf32, #tpu.memory_space<vmem>>, vector<128x256xf32>
    %c0_2 = arith.constant 0 : index
    %c0_3 = arith.constant 0 : index
    %4 = vector.load %arg9[%c0_2, %c0_3] : memref<128x256xf32, #tpu.memory_space<vmem>>, vector<128x256xf32>
    %c0_4 = arith.constant 0 : index
    %c0_5 = arith.constant 0 : index
    %5 = vector.load %arg4[%c0_4, %c0_5] : memref<256x256xf32, #tpu.memory_space<vmem>>, vector<256x256xf32>
    %cst = arith.constant dense<0.000000e+00> : vector<128x256xf32>
    %6 = tpu.matmul %3, %5, %cst {dimension_numbers = #tpu.dot_dimension_numbers<[1], [0], [0], [1], [0, 0, 1, 1], [], []>} : vector<128x256xf32>, vector<256x256xf32>, vector<128x256xf32> -> vector<128x256xf32>
    %7 = arith.addf %4, %6 : vector<128x256xf32>
    %c0_6 = arith.constant 0 : index
    %c0_7 = arith.constant 0 : index
    %8 = vector.load %arg9[%c0_6, %c0_7] : memref<128x256xf32, #tpu.memory_space<vmem>>, vector<128x256xf32>
    tpu.vector_store %arg9[%c0_6, %c0_7], %7 {strides = array<i32>} : memref<128x256xf32, #tpu.memory_space<vmem>>, vector<128x256xf32>,
    %c0_8 = arith.constant 0 : index
    %c0_9 = arith.constant 0 : index
    %9 = vector.load %arg10[%c0_8, %c0_9] : memref<128x8xf32, #tpu.memory_space<vmem>>, vector<128x8xf32>
    %c0_10 = arith.constant 0 : index
    %c0_11 = arith.constant 0 : index
    %10 = vector.load %arg6[%c0_10, %c0_11] : memref<256x8xf32, #tpu.memory_space<vmem>>, vector<256x8xf32>
    %cst_12 = arith.constant dense<0.000000e+00> : vector<128x8xf32>
    %11 = tpu.matmul %3, %10, %cst_12 {dimension_numbers = #tpu.dot_dimension_numbers<[1], [0], [0], [1], [0, 0, 1, 1], [], []>} : vector<128x256xf32>, vector<256x8xf32>, vector<128x8xf32> -> vector<128x8xf32>
    %12 = arith.addf %9, %11 : vector<128x8xf32>
    %c0_13 = arith.constant 0 : index
    %c0_14 = arith.constant 0 : index
    %13 = vector.load %arg10[%c0_13, %c0_14] : memref<128x8xf32, #tpu.memory_space<vmem>>, vector<128x8xf32>
    tpu.vector_store %arg10[%c0_13, %c0_14], %12 {strides = array<i32>} : memref<128x8xf32, #tpu.memory_space<vmem>>, vector<128x8xf32>,
    %c1_i32 = arith.constant 1 : i32
    %14 = arith.cmpi eq, %arg2, %c1_i32 : i32
    %15 = arith.extui %14 : i1 to i32
    %c0_i32_15 = arith.constant 0 : i32
    %16 = arith.cmpi ne, %15, %c0_i32_15 : i32
    scf.if %16 {
      %c0_16 = arith.constant 0 : index
      %c0_17 = arith.constant 0 : index
      %17 = vector.load %arg10[%c0_16, %c0_17] : memref<128x8xf32, #tpu.memory_space<vmem>>, vector<128x8xf32>
      %c0_18 = arith.constant 0 : index
      %c0_19 = arith.constant 0 : index
      %18 = vector.load %arg7[%c0_18, %c0_19] : memref<8x256xf32, #tpu.memory_space<vmem>>, vector<8x256xf32>
      %cst_20 = arith.constant dense<0.000000e+00> : vector<128x256xf32>
      %19 = tpu.matmul %17, %18, %cst_20 {dimension_numbers = #tpu.dot_dimension_numbers<[1], [0], [0], [1], [0, 0, 1, 1], [], []>} : vector<128x8xf32>, vector<8x256xf32>, vector<128x256xf32> -> vector<128x256xf32>
      %c0_21 = arith.constant 0 : index
      %c0_22 = arith.constant 0 : index
      %20 = vector.load %arg9[%c0_21, %c0_22] : memref<128x256xf32, #tpu.memory_space<vmem>>, vector<128x256xf32>
      %c0_23 = arith.constant 0 : index
      %c0_24 = arith.constant 0 : index
      %21 = vector.load %arg5[%c0_23, %c0_24] : memref<1x256xf32, #tpu.memory_space<vmem>>, vector<1x256xf32>
      %22 = vector.broadcast %21 : vector<1x256xf32> to vector<128x256xf32>
      %23 = arith.addf %20, %22 : vector<128x256xf32>
      %24 = arith.addf %23, %19 : vector<128x256xf32>
      %c0_25 = arith.constant 0 : index
      %c0_26 = arith.constant 0 : index
      %25 = vector.load %arg8[%c0_25, %c0_26] : memref<128x256xf32, #tpu.memory_space<vmem>>, vector<128x256xf32>
      tpu.vector_store %arg8[%c0_25, %c0_26], %24 {strides = array<i32>} : memref<128x256xf32, #tpu.memory_space<vmem>>, vector<128x256xf32>,
    } else {
    }
    return
  }
  func.func @transform_0(%arg0: i32, %arg1: i32, %arg2: i32) -> (i32, i32) {
    %c0_i32 = arith.constant 0 : i32
    return %arg0, %arg2 : i32, i32
  }
  func.func @transform_1(%arg0: i32, %arg1: i32, %arg2: i32) -> (i32, i32) {
    %c0_i32 = arith.constant 0 : i32
    return %arg2, %arg1 : i32, i32
  }
  func.func @transform_2(%arg0: i32, %arg1: i32, %arg2: i32) -> (i32, i32) {
    %c0_i32 = arith.constant 0 : i32
    %c0_i32_0 = arith.constant 0 : i32
    return %c0_i32, %arg1 : i32, i32
  }
  func.func @transform_3(%arg0: i32, %arg1: i32, %arg2: i32) -> (i32, i32) {
    %c0_i32 = arith.constant 0 : i32
    %c0_i32_0 = arith.constant 0 : i32
    return %arg2, %c0_i32 : i32, i32
  }
  func.func @transform_4(%arg0: i32, %arg1: i32, %arg2: i32) -> (i32, i32) {
    %c0_i32 = arith.constant 0 : i32
    %c0_i32_0 = arith.constant 0 : i32
    return %c0_i32, %arg1 : i32, i32
  }
  func.func @transform_5(%arg0: i32, %arg1: i32, %arg2: i32) -> (i32, i32) {
    %c0_i32 = arith.constant 0 : i32
    return %arg0, %arg1 : i32, i32
  }
}

</mosaic_0001>

<llo_original>
// kernel: tpu_custom_call.1
$region0: #{tpu_custom_call.1}
  #allocation0 [shape = 'u32[]', space=smem, size = 0x4, offset = 0x4, fixed_abs, tag = 'smem constant byte address 0x4 - core index']
  #allocation1 [shape = 'u32[72,128]{1,0:T(1,128)}', space=vmem, size = 0x9000, scoped, tag = 'internal scratch']
  #allocation2 [shape = 'f32[128,256]{1,0:T(8,128)}', space=vmem, size = 0x20000, scoped, tag = 'scratch operand']
  #allocation3 [shape = 'f32[128,8]{1,0:T(8,128)}', space=vmem, size = 0x10000, scoped, tag = 'scratch operand']
  %s0 = inlined_call_operand.vmem [shape: f32[128,512], index: 0, kind: input, shape index: {}]
  %s1 = inlined_call_operand.hbm [shape: f32[512,512], index: 1, kind: input, shape index: {}]
  %s2 = inlined_call_operand.hbm [shape: f32[1,512], index: 2, kind: input, shape index: {}]
  %s3 = inlined_call_operand.vmem [shape: f32[512,8], index: 3, kind: input, shape index: {}]
  %s4 = inlined_call_operand.vmem [shape: f32[8,512], index: 4, kind: input, shape index: {}]
  %s5 = inlined_call_operand.hbm [shape: f32[128,512], index: 5, kind: output, shape index: {}]
  %s6 = sld [smem:[#allocation0]]
  $region92: #{tpu_custom_call.1} parent=0
    _
  %s8 = ssub.s32 1, %s6
  %s9 = scalar_select 0, %s8, %s6
  $region1: #{tpu_custom_call.1} parent=0
    #allocation4 [shape = 'u8[262144]{0}', space=vmem, size = 0x40000, scoped, tag = 'input window, operand 0']
    #allocation5 [shape = 'u8[524288]{0}', space=vmem, size = 0x80000, scoped, tag = 'input window, operand 1']
    #allocation6 [shape = 's32[2]{0}', space=sflag, size = 0x8, scoped, tag = 'scoped memory for tpu_custom_call.1']
    #allocation7 [shape = 's32[2]{0}', space=sflag, size = 0x8, scoped, tag = 'scoped memory for tpu_custom_call.1']
    #allocation8 [shape = 'u8[2048]{0}', space=vmem, size = 0x800, scoped, tag = 'input window, operand 2']
    #allocation9 [shape = 's32[2]{0}', space=sflag, size = 0x8, scoped, tag = 'scoped memory for tpu_custom_call.1']
    #allocation10 [shape = 'u8[262144]{0}', space=vmem, size = 0x40000, scoped, tag = 'output window, operand 0']
    %10 = vsyncpa [#allocation6], 0
    %s11 = scalar_lea.sflag [#allocation6], 1
    %12 = vsyncpa %s11, 0
    %13 = vsyncpa [#allocation9], 0
    %s14 = scalar_lea.sflag [#allocation9], 1
    %15 = vsyncpa %s14, 0
    %16 = vsyncpa [#allocation7], 0
    %s17 = scalar_lea.sflag [#allocation7], 1
    %18 = vsyncpa %s17, 0
    loop: start=0, step=1, limit=6
    $region2: #{tpu_custom_call.1} parent=1 // loop_pre_header
      _
    $region3: #{tpu_custom_call.1} parent=1 // loop_header
      %s20 = sphi 0, %s24
      %p21 = scmp.ge.s32.totalorder %s20, 6
      %s27 = sphi 0, %s46
      %s28 = sphi 0, %s42
      %s29 = sphi 0, %s38
      %s30 = sphi 0, %s27
      %s31 = sphi 0, %s28
      %s32 = sphi 0, %s29
      %s33 = sphi 0, %s30
      %s34 = sphi 0, %s31
      %s35 = sphi 0, %s32
      %s51 = sphi 0, %s53
      %s54 = sphi 0, %s51
      %s55 = sphi 0, %s54
      %s71 = sphi 0, %s55
      %s79 = sphi 0, %s81
      %s82 = sphi 0, %s79
      %s83 = sphi 0, %s82
      %s99 = sphi 0, %s83
      %s105 = sphi 0, %s107
      %s108 = sphi 0, %s105
      %s109 = sphi 0, %s108
      %s125 = sphi 0, %s109
      %s131 = sphi 0, %s133
      %s134 = sphi 0, %s131
      %s135 = sphi 0, %s134
      %s151 = sphi 0, %s135
      %s157 = sphi 0, %s159
      %s160 = sphi 0, %s157
      %s161 = sphi 0, %s160
      %s177 = sphi 0, %s161
      %s185 = sphi 0, %s187
      %s188 = sphi 0, %s185
      %s189 = sphi 0, %s188
      %s205 = sphi 0, %s189
    $region4: #{tpu_custom_call.1} parent=1 // loop_header_branch
      %23 = sbr.rel (%p21) target = $region8
    $region5: #{tpu_custom_call.1} parent=1 // loop_body
      %s25 = ssub.s32 %s20, 1
      %s26 = ssub.s32 %s20, 2
      %s36 = sadd.s32 1, %s29
      %p37 = scmp.ge.s32.totalorder %s36, 2
      %s38 = scalar_select %p37, 0, %s36
      %s39 = sadd.s32 1, %s28
      %s40 = scalar_select %p37, %s39, %s28
      %p41 = scmp.ge.s32.totalorder %s40, 2
      %s42 = scalar_select %p41, 0, %s40
      %s43 = sadd.s32 1, %s27
      %s44 = scalar_select %p41, %s43, %s27
      %p45 = scmp.ge.s32.totalorder %s44, 1
      %s46 = scalar_select %p45, 0, %s44
      %s47 = ssub.s32 %s27, %s46
      %s48 = ssub.s32 %s29, %s38
      %s49 = sor.u32 %s47, %s48
      %p50 = scmp.eq.s32.totalorder %s49, 0
      %s52 = sadd.s32 %s51, 1
      %s53 = scalar_select %p50, %s51, %s52
      %p56 = pneg %p50
      %p57 = scmp.eq.s32.totalorder %s20, 3
      %p58 = por %p56, %p57
      %p59 = scmp.ne.s32.totalorder %s51, %s54
      %p60 = scmp.eq.s32.totalorder %s20, 0
      %p61 = por %p59, %p60
      %p62 = scmp.ne.s32.totalorder %s51, %s54
      %p63 = scmp.eq.s32.totalorder %s25, 3
      %p64 = por %p62, %p63
      %p65 = scmp.ne.s32.totalorder %s54, %s55
      %p66 = scmp.eq.s32.totalorder %s25, 0
      %p67 = por %p65, %p66
      %p68 = scmp.ne.s32.totalorder %s54, %s55
      %p69 = scmp.eq.s32.totalorder %s26, 3
      %p70 = por %p68, %p69
      %p72 = scmp.ne.s32.totalorder %s55, %s71
      %p73 = scmp.eq.s32.totalorder %s26, 0
      %p74 = por %p72, %p73
      %s75 = ssub.s32 %s29, %s38
      %s76 = ssub.s32 %s28, %s42
      %s77 = sor.u32 %s75, %s76
      %p78 = scmp.eq.s32.totalorder %s77, 0
      %s80 = sadd.s32 %s79, 1
      %s81 = scalar_select %p78, %s79, %s80
      %p84 = pneg %p78
      %p85 = scmp.eq.s32.totalorder %s20, 3
      %p86 = por %p84, %p85
      %p87 = scmp.ne.s32.totalorder %s79, %s82
      %p88 = scmp.eq.s32.totalorder %s20, 0
      %p89 = por %p87, %p88
      %p90 = scmp.ne.s32.totalorder %s79, %s82
      %p91 = scmp.eq.s32.totalorder %s25, 3
      %p92 = por %p90, %p91
      %p93 = scmp.ne.s32.totalorder %s82, %s83
      %p94 = scmp.eq.s32.totalorder %s25, 0
      %p95 = por %p93, %p94
      %p96 = scmp.ne.s32.totalorder %s82, %s83
      %p97 = scmp.eq.s32.totalorder %s26, 3
      %p98 = por %p96, %p97
      %p100 = scmp.ne.s32.totalorder %s83, %s99
      %p101 = scmp.eq.s32.totalorder %s26, 0
      %p102 = por %p100, %p101
      %s103 = ssub.s32 %s28, %s42
      %p104 = scmp.eq.s32.totalorder %s103, 0
      %s106 = sadd.s32 %s105, 1
      %s107 = scalar_select %p104, %s105, %s106
      %p110 = pneg %p104
      %p111 = scmp.eq.s32.totalorder %s20, 3
      %p112 = por %p110, %p111
      %p113 = scmp.ne.s32.totalorder %s105, %s108
      %p114 = scmp.eq.s32.totalorder %s20, 0
      %p115 = por %p113, %p114
      %p116 = scmp.ne.s32.totalorder %s105, %s108
      %p117 = scmp.eq.s32.totalorder %s25, 3
      %p118 = por %p116, %p117
      %p119 = scmp.ne.s32.totalorder %s108, %s109
      %p120 = scmp.eq.s32.totalorder %s25, 0
      %p121 = por %p119, %p120
      %p122 = scmp.ne.s32.totalorder %s108, %s109
      %p123 = scmp.eq.s32.totalorder %s26, 3
      %p124 = por %p122, %p123
      %p126 = scmp.ne.s32.totalorder %s109, %s125
      %p127 = scmp.eq.s32.totalorder %s26, 0
      %p128 = por %p126, %p127
      %s129 = ssub.s32 %s29, %s38
      %p130 = scmp.eq.s32.totalorder %s129, 0
      %s132 = sadd.s32 %s131, 1
      %s133 = scalar_select %p130, %s131, %s132
      %p136 = pneg %p130
      %p137 = scmp.eq.s32.totalorder %s20, 3
      %p138 = por %p136, %p137
      %p139 = scmp.ne.s32.totalorder %s131, %s134
      %p140 = scmp.eq.s32.totalorder %s20, 0
      %p141 = por %p139, %p140
      %p142 = scmp.ne.s32.totalorder %s131, %s134
      %p143 = scmp.eq.s32.totalorder %s25, 3
      %p144 = por %p142, %p143
      %p145 = scmp.ne.s32.totalorder %s134, %s135
      %p146 = scmp.eq.s32.totalorder %s25, 0
      %p147 = por %p145, %p146
      %p148 = scmp.ne.s32.totalorder %s134, %s135
      %p149 = scmp.eq.s32.totalorder %s26, 3
      %p150 = por %p148, %p149
      %p152 = scmp.ne.s32.totalorder %s135, %s151
      %p153 = scmp.eq.s32.totalorder %s26, 0
      %p154 = por %p152, %p153
      %s155 = ssub.s32 %s28, %s42
      %p156 = scmp.eq.s32.totalorder %s155, 0
      %s158 = sadd.s32 %s157, 1
      %s159 = scalar_select %p156, %s157, %s158
      %p162 = pneg %p156
      %p163 = scmp.eq.s32.totalorder %s20, 3
      %p164 = por %p162, %p163
      %p165 = scmp.ne.s32.totalorder %s157, %s160
      %p166 = scmp.eq.s32.totalorder %s20, 0
      %p167 = por %p165, %p166
      %p168 = scmp.ne.s32.totalorder %s157, %s160
      %p169 = scmp.eq.s32.totalorder %s25, 3
      %p170 = por %p168, %p169
      %p171 = scmp.ne.s32.totalorder %s160, %s161
      %p172 = scmp.eq.s32.totalorder %s25, 0
      %p173 = por %p171, %p172
      %p174 = scmp.ne.s32.totalorder %s160, %s161
      %p175 = scmp.eq.s32.totalorder %s26, 3
      %p176 = por %p174, %p175
      %p178 = scmp.ne.s32.totalorder %s161, %s177
      %p179 = scmp.eq.s32.totalorder %s26, 0
      %p180 = por %p178, %p179
      %s181 = ssub.s32 %s27, %s46
      %s182 = ssub.s32 %s28, %s42
      %s183 = sor.u32 %s181, %s182
      %p184 = scmp.eq.s32.totalorder %s183, 0
      %s186 = sadd.s32 %s185, 1
      %s187 = scalar_select %p184, %s185, %s186
      %p190 = pneg %p184
      %p191 = scmp.eq.s32.totalorder %s20, 3
      %p192 = por %p190, %p191
      %p193 = scmp.ne.s32.totalorder %s185, %s188
      %p194 = scmp.eq.s32.totalorder %s20, 0
      %p195 = por %p193, %p194
      %p196 = scmp.ne.s32.totalorder %s185, %s188
      %p197 = scmp.eq.s32.totalorder %s25, 3
      %p198 = por %p196, %p197
      %p199 = scmp.ne.s32.totalorder %s188, %s189
      %p200 = scmp.eq.s32.totalorder %s25, 0
      %p201 = por %p199, %p200
      %p202 = scmp.ne.s32.totalorder %s188, %s189
      %p203 = scmp.eq.s32.totalorder %s26, 3
      %p204 = por %p202, %p203
      %p206 = scmp.ne.s32.totalorder %s189, %s205
      %p207 = scmp.eq.s32.totalorder %s26, 0
      %p208 = por %p206, %p207
      %p209 = scmp.le.s32.totalorder 1, %s20
      %p210 = scmp.lt.s32.totalorder %s20, 5
      %p211 = pnand %p209, %p210
      %p212 = pneg %p211
      // Predicated region
      $region9: #{tpu_custom_call.1} parent=5 // pred_check
        _
      $region10: #{tpu_custom_call.1} parent=5 // pred_check_branch
        %214 = sbr.rel (%p211) target = $region12
      $region11: #{tpu_custom_call.1} parent=5 // pred_region
        %s215 = ssub.s32 %s20, 1
      $region12: #{tpu_custom_call.1} parent=5 // pred_fallthru
        _
      %p216 = scmp.lt.s32.totalorder %s20, 4
      // Predicated region
      $region13: #{tpu_custom_call.1} parent=5 // pred_check
        %p217 = pneg %p216
      $region14: #{tpu_custom_call.1} parent=5 // pred_check_branch
        %219 = sbr.rel (%p217) target = $region16
      $region15: #{tpu_custom_call.1} parent=5 // pred_region
        // Predicated region
        $region17: #{tpu_custom_call.1} parent=15 // pred_check
          %p220 = pneg %p61
        $region18: #{tpu_custom_call.1} parent=15 // pred_check_branch
          %222 = sbr.rel (%p220) target = $region20
        $region19: #{tpu_custom_call.1} parent=15 // pred_region
          %s223 = sand.u32 %s51, 1
          %s224 = sand.u32 %s51, 1
          %s225 = smul.addr %s224, 256
          %s226 = scalar_lea.vmem [#allocation4], %s225
          %s227 = smul.u32 16, %s27
          %s228 = smul.u32 2, %s29
          %s229 = smul.addr %s227, 4
          %s230 = sadd.s32 %s228, %s229
          %s231 = smul.addr %s230, 8
          %s232 = scalar_lea.vmem %s0, %s231
          // Predicated region
          $region21: #{tpu_custom_call.1} parent=19 // pred_check
            _
          $region22: #{tpu_custom_call.1} parent=19 // pred_check_branch
            %234 = sbr.rel (0) target = $region24
          $region23: #{tpu_custom_call.1} parent=19 // pred_region
            // Predicated region
            $region25: #{tpu_custom_call.1} parent=23 // pred_check
              _
            $region26: #{tpu_custom_call.1} parent=23 // pred_check_branch
              %236 = sbr.rel (0) target = $region28
            $region27: #{tpu_custom_call.1} parent=23 // pred_region
              loop: start=0, step=1, limit=1
              $region29: #{tpu_custom_call.1} parent=27 // loop_pre_header
                _
              $region30: #{tpu_custom_call.1} parent=27 // loop_header
                %s238 = sphi 0, %s242
                %p239 = scmp.ge.s32.totalorder %s238, 1
                %s243 = sphi %s232, %s232
                %s244 = sphi %s226, %s226
              $region31: #{tpu_custom_call.1} parent=27 // loop_header_branch
                %241 = sbr.rel (%p239) target = $region35
              $region32: #{tpu_custom_call.1} parent=27 // loop_body
                %v245 = vld [vmem:[%s243] sm:$0xff]
                %246 = vst [vmem:[%s244] sm:$0xff] %v245
                %v247 = vld [vmem:[%s243 + $0x8] sm:$0xff]
                %248 = vst [vmem:[%s244 + $0x8] sm:$0xff] %v247
                %v249 = vld [vmem:[%s243 + $0x20] sm:$0xff]
                %250 = vst [vmem:[%s244 + $0x10] sm:$0xff] %v249
                %v251 = vld [vmem:[%s243 + $0x28] sm:$0xff]
                %252 = vst [vmem:[%s244 + $0x18] sm:$0xff] %v251
                %v253 = vld [vmem:[%s243 + $0x40] sm:$0xff]
                %254 = vst [vmem:[%s244 + $0x20] sm:$0xff] %v253
                %v255 = vld [vmem:[%s243 + $0x48] sm:$0xff]
                %256 = vst [vmem:[%s244 + $0x28] sm:$0xff] %v255
                %v257 = vld [vmem:[%s243 + $0x60] sm:$0xff]
                %258 = vst [vmem:[%s244 + $0x30] sm:$0xff] %v257
                %v259 = vld [vmem:[%s243 + $0x68] sm:$0xff]
                %260 = vst [vmem:[%s244 + $0x38] sm:$0xff] %v259
                %v261 = vld [vmem:[%s243 + $0x80] sm:$0xff]
                %262 = vst [vmem:[%s244 + $0x40] sm:$0xff] %v261
                %v263 = vld [vmem:[%s243 + $0x88] sm:$0xff]
                %264 = vst [vmem:[%s244 + $0x48] sm:$0xff] %v263
                %v265 = vld [vmem:[%s243 + $0xa0] sm:$0xff]
                %266 = vst [vmem:[%s244 + $0x50] sm:$0xff] %v265
                %v267 = vld [vmem:[%s243 + $0xa8] sm:$0xff]
                %268 = vst [vmem:[%s244 + $0x58] sm:$0xff] %v267
                %v269 = vld [vmem:[%s243 + $0xc0] sm:$0xff]
                %270 = vst [vmem:[%s244 + $0x60] sm:$0xff] %v269
                %v271 = vld [vmem:[%s243 + $0xc8] sm:$0xff]
                %272 = vst [vmem:[%s244 + $0x68] sm:$0xff] %v271
                %v273 = vld [vmem:[%s243 + $0xe0] sm:$0xff]
                %274 = vst [vmem:[%s244 + $0x70] sm:$0xff] %v273
                %v275 = vld [vmem:[%s243 + $0xe8] sm:$0xff]
                %276 = vst [vmem:[%s244 + $0x78] sm:$0xff] %v275
                %v277 = vld [vmem:[%s243 + $0x100] sm:$0xff]
                %278 = vst [vmem:[%s244 + $0x80] sm:$0xff] %v277
                %v279 = vld [vmem:[%s243 + $0x108] sm:$0xff]
                %280 = vst [vmem:[%s244 + $0x88] sm:$0xff] %v279
                %v281 = vld [vmem:[%s243 + $0x120] sm:$0xff]
                %282 = vst [vmem:[%s244 + $0x90] sm:$0xff] %v281
                %v283 = vld [vmem:[%s243 + $0x128] sm:$0xff]
                %284 = vst [vmem:[%s244 + $0x98] sm:$0xff] %v283
                %v285 = vld [vmem:[%s243 + $0x140] sm:$0xff]
                %286 = vst [vmem:[%s244 + $0xa0] sm:$0xff] %v285
                %v287 = vld [vmem:[%s243 + $0x148] sm:$0xff]
                %288 = vst [vmem:[%s244 + $0xa8] sm:$0xff] %v287
                %v289 = vld [vmem:[%s243 + $0x160] sm:$0xff]
                %290 = vst [vmem:[%s244 + $0xb0] sm:$0xff] %v289
                %v291 = vld [vmem:[%s243 + $0x168] sm:$0xff]
                %292 = vst [vmem:[%s244 + $0xb8] sm:$0xff] %v291
                %v293 = vld [vmem:[%s243 + $0x180] sm:$0xff]
                %294 = vst [vmem:[%s244 + $0xc0] sm:$0xff] %v293
                %v295 = vld [vmem:[%s243 + $0x188] sm:$0xff]
                %296 = vst [vmem:[%s244 + $0xc8] sm:$0xff] %v295
                %v297 = vld [vmem:[%s243 + $0x1a0] sm:$0xff]
                %298 = vst [vmem:[%s244 + $0xd0] sm:$0xff] %v297
                %v299 = vld [vmem:[%s243 + $0x1a8] sm:$0xff]
                %300 = vst [vmem:[%s244 + $0xd8] sm:$0xff] %v299
                %v301 = vld [vmem:[%s243 + $0x1c0] sm:$0xff]
                %302 = vst [vmem:[%s244 + $0xe0] sm:$0xff] %v301
                %v303 = vld [vmem:[%s243 + $0x1c8] sm:$0xff]
                %304 = vst [vmem:[%s244 + $0xe8] sm:$0xff] %v303
                %v305 = vld [vmem:[%s243 + $0x1e0] sm:$0xff]
                %306 = vst [vmem:[%s244 + $0xf0] sm:$0xff] %v305
                %v307 = vld [vmem:[%s243 + $0x1e8] sm:$0xff]
                %308 = vst [vmem:[%s244 + $0xf8] sm:$0xff] %v307
              $region33: #{tpu_custom_call.1} parent=27 // loop_footer
                %s242 = sadd.s32 1, %s238
              $region34: #{tpu_custom_call.1} parent=27 // loop_footer_branch
                %237 = sbr.rel target = $region30
              $region35: #{tpu_custom_call.1} parent=27 // loop_exit
                _
            $region28: #{tpu_custom_call.1} parent=23 // pred_fallthru
              _
            // Predicated region
            $region36: #{tpu_custom_call.1} parent=23 // pred_check
              _
            $region37: #{tpu_custom_call.1} parent=23 // pred_check_branch
              %310 = sbr.rel target = $region39
            $region38: #{tpu_custom_call.1} parent=23 // pred_region
              _
            $region39: #{tpu_custom_call.1} parent=23 // pred_fallthru
              _
          $region24: #{tpu_custom_call.1} parent=19 // pred_fallthru
            _
          %311 = vnop
        $region20: #{tpu_custom_call.1} parent=15 // pred_fallthru
          _
        // Predicated region
        $region40: #{tpu_custom_call.1} parent=15 // pred_check
          %p312 = pneg %p89
        $region41: #{tpu_custom_call.1} parent=15 // pred_check_branch
          %314 = sbr.rel (%p312) target = $region43
        $region42: #{tpu_custom_call.1} parent=15 // pred_region
          %s315 = sand.u32 %s79, 1
          %s316 = scalar_lea.sflag [#allocation6], %s315
          %s317 = sand.u32 %s79, 1
          %s318 = smul.addr %s317, 512
          %s319 = scalar_lea.vmem [#allocation5], %s318
          %s320 = smul.u32 32, %s29
          %s321 = smul.u32 2, %s28
          %323 = vsyncadd %s316, 0
          %s324 = smul.addr %s320, 4
          %s325 = sadd.s32 %s321, %s324
          %s326 = smul.addr %s325, 8
          %s327 = scalar_lea.hbm %s1, %s326
          %s328 = sshll.u32 %s327, 4
          %s329 = int_to_ptr.hbm [resolvable:$true] %s328
          %s330 = sshll.u32 %s319, 4
          %s331 = int_to_ptr.vmem [resolvable:$true] %s330
          %336 = dma.hbm_to_vmem [thread:$0]  %s329, 8192, %s331, %s316, 512, 256, 16
        $region43: #{tpu_custom_call.1} parent=15 // pred_fallthru
          _
        // Predicated region
        $region44: #{tpu_custom_call.1} parent=15 // pred_check
          %p337 = pneg %p115
        $region45: #{tpu_custom_call.1} parent=15 // pred_check_branch
          %339 = sbr.rel (%p337) target = $region47
        $region46: #{tpu_custom_call.1} parent=15 // pred_region
          %s340 = sand.u32 %s105, 1
          %s341 = scalar_lea.sflag [#allocation9], %s340
          %s342 = sand.u32 %s105, 1
          %s343 = smul.addr %s342, 2
          %s344 = scalar_lea.vmem [#allocation8], %s343
          %s345 = smul.u32 2, %s28
          %347 = vsyncadd %s341, 0
          %s348 = scalar_lea.hbm %s2, %s345
          %s350 = sshll.u32 %s348, 4
          %s351 = int_to_ptr.hbm [resolvable:$true] %s350
          %s352 = sshll.u32 %s344, 4
          %s353 = int_to_ptr.vmem [resolvable:$true] %s352
          %355 = dma.hbm_to_vmem [thread:$0]  %s351, 32, %s353, %s341
        $region47: #{tpu_custom_call.1} parent=15 // pred_fallthru
          _
        // Predicated region
        $region48: #{tpu_custom_call.1} parent=15 // pred_check
          %p356 = pneg %p141
        $region49: #{tpu_custom_call.1} parent=15 // pred_check_branch
          %358 = sbr.rel (%p356) target = $region51
        $region50: #{tpu_custom_call.1} parent=15 // pred_region
          %s359 = smul.u32 32, %s29
          %p360 = scmp.lt.s32.totalorder %s359, 63
          %s361 = scalar_select %p360, %s359, 63
          %s362 = smul.addr %s361, 8
          %s363 = scalar_lea.vmem %s3, %s362
          %s364 = smul.u32 32, %s29
        $region51: #{tpu_custom_call.1} parent=15 // pred_fallthru
          _
        // Predicated region
        $region52: #{tpu_custom_call.1} parent=15 // pred_check
          %p365 = pneg %p167
        $region53: #{tpu_custom_call.1} parent=15 // pred_check_branch
          %367 = sbr.rel (%p365) target = $region55
        $region54: #{tpu_custom_call.1} parent=15 // pred_region
          %s368 = smul.u32 2, %s28
          %p369 = scmp.lt.s32.totalorder %s368, 3
          %s370 = scalar_select %p369, %s368, 3
          %s371 = smul.addr %s370, 8
          %s372 = scalar_lea.vmem %s4, %s371
          %s373 = smul.u32 2, %s28
        $region55: #{tpu_custom_call.1} parent=15 // pred_fallthru
          _
      $region16: #{tpu_custom_call.1} parent=5 // pred_fallthru
        _
      %p374 = scmp.le.s32.totalorder 1, %s20
      %p375 = scmp.lt.s32.totalorder %s20, 5
      %p376 = pnand %p374, %p375
      %p377 = pneg %p376
      // Predicated region
      $region56: #{tpu_custom_call.1} parent=5 // pred_check
        _
      $region57: #{tpu_custom_call.1} parent=5 // pred_check_branch
        %379 = sbr.rel (%p376) target = $region59
      $region58: #{tpu_custom_call.1} parent=5 // pred_region
        %s380 = ssub.s32 %s20, 1
        %s381 = sand.u32 %s54, 1
        %s382 = sand.u32 %s54, 1
        %s383 = smul.addr %s382, 256
        %s384 = scalar_lea.vmem [#allocation4], %s383
        // Predicated region
        $region60: #{tpu_custom_call.1} parent=58 // pred_check
          %p385 = pneg %p67
        $region61: #{tpu_custom_call.1} parent=58 // pred_check_branch
          %387 = sbr.rel (%p385) target = $region63
        $region62: #{tpu_custom_call.1} parent=58 // pred_region
          _
        $region63: #{tpu_custom_call.1} parent=58 // pred_fallthru
          _
        %s388 = sand.u32 %s82, 1
        %s389 = scalar_lea.sflag [#allocation6], %s388
        %s390 = sand.u32 %s82, 1
        %s391 = smul.addr %s390, 512
        %s392 = scalar_lea.vmem [#allocation5], %s391
        // Predicated region
        $region64: #{tpu_custom_call.1} parent=58 // pred_check
          %p393 = pneg %p95
        $region65: #{tpu_custom_call.1} parent=58 // pred_check_branch
          %395 = sbr.rel (%p393) target = $region67
        $region66: #{tpu_custom_call.1} parent=58 // pred_region
          %397 = dma.done %s389, 8192
        $region67: #{tpu_custom_call.1} parent=58 // pred_fallthru
          _
        %s398 = sand.u32 %s108, 1
        %s399 = scalar_lea.sflag [#allocation9], %s398
        %s400 = sand.u32 %s108, 1
        %s401 = smul.addr %s400, 2
        %s402 = scalar_lea.vmem [#allocation8], %s401
        // Predicated region
        $region68: #{tpu_custom_call.1} parent=58 // pred_check
          %p403 = pneg %p121
        $region69: #{tpu_custom_call.1} parent=58 // pred_check_branch
          %405 = sbr.rel (%p403) target = $region71
        $region70: #{tpu_custom_call.1} parent=58 // pred_region
          %407 = dma.done %s399, 32
        $region71: #{tpu_custom_call.1} parent=58 // pred_fallthru
          _
        %s408 = sand.u32 %s54, 1
        %s409 = sand.u32 %s54, 1
        %s410 = smul.addr %s409, 256
        %s411 = scalar_lea.vmem [#allocation4], %s410
        %p412 = pneg %p67
        %p413 = pneg %p64
        %s414 = sand.u32 %s82, 1
        %s415 = scalar_lea.sflag [#allocation6], %s414
        %s416 = sand.u32 %s82, 1
        %s417 = smul.addr %s416, 512
        %s418 = scalar_lea.vmem [#allocation5], %s417
        %p419 = pneg %p95
        %p420 = pneg %p92
        %s421 = sand.u32 %s108, 1
        %s422 = scalar_lea.sflag [#allocation9], %s421
        %s423 = sand.u32 %s108, 1
        %s424 = smul.addr %s423, 2
        %s425 = scalar_lea.vmem [#allocation8], %s424
        %p426 = pneg %p121
        %p427 = pneg %p118
        %s428 = smul.u32 32, %s32
        %p429 = scmp.lt.s32.totalorder %s428, 63
        %s430 = scalar_select %p429, %s428, 63
        %s431 = smul.addr %s430, 8
        %s432 = scalar_lea.vmem %s3, %s431
        %p433 = pneg %p147
        %p434 = pneg %p144
        %s435 = smul.u32 2, %s31
        %p436 = scmp.lt.s32.totalorder %s435, 3
        %s437 = scalar_select %p436, %s435, 3
        %s438 = smul.addr %s437, 8
        %s439 = scalar_lea.vmem %s4, %s438
        %p440 = pneg %p173
        %p441 = pneg %p170
        %p442 = pneg %p201
        %p443 = pneg %p198
        %s444 = sand.u32 %s188, 1
        %s445 = scalar_lea.sflag [#allocation7], %s444
        %s446 = sand.u32 %s188, 1
        %s447 = smul.addr %s446, 256
        %s448 = scalar_lea.vmem [#allocation10], %s447
        %s449 = smul.u32 16, %s30
        %s450 = smul.u32 2, %s32
        %s451 = smul.u32 32, %s32
        %s452 = smul.u32 2, %s31
        %s453 = smul.u32 2, %s31
        %s454 = smul.u32 32, %s32
        %p455 = scmp.lt.s32.totalorder %s454, 63
        %s456 = scalar_select %p455, %s454, 63
        %s457 = smul.addr %s456, 8
        %s458 = scalar_lea.vmem %s3, %s457
        %s459 = smul.u32 32, %s32
        %s460 = smul.u32 2, %s31
        %p461 = scmp.lt.s32.totalorder %s460, 3
        %s462 = scalar_select %p461, %s460, 3
        %s463 = smul.addr %s462, 8
        %s464 = scalar_lea.vmem %s4, %s463
        %s465 = smul.u32 2, %s31
        %s466 = smul.u32 16, %s30
        %s467 = smul.u32 2, %s31
        %p468 = scmp.eq.s32.totalorder %s32, 0
        // Predicated region
        $region72: #{tpu_custom_call.1} parent=58 // pred_check
          %p469 = pneg %p468
        $region73: #{tpu_custom_call.1} parent=58 // pred_check_branch
          %471 = sbr.rel (%p469) target = $region75
        $region74: #{tpu_custom_call.1} parent=58 // pred_region
          %472 = vst [vmem:[#allocation2] sm:$0xff] 0.0
          %473 = vst [vmem:[#allocation2 + $0x8] sm:$0xff] 0.0
          %474 = vst [vmem:[#allocation2 + $0x10] sm:$0xff] 0.0
          %475 = vst [vmem:[#allocation2 + $0x18] sm:$0xff] 0.0
          %476 = vst [vmem:[#allocation2 + $0x20] sm:$0xff] 0.0
          %477 = vst [vmem:[#allocation2 + $0x28] sm:$0xff] 0.0
          %478 = vst [vmem:[#allocation2 + $0x30] sm:$0xff] 0.0
          %479 = vst [vmem:[#allocation2 + $0x38] sm:$0xff] 0.0
          %480 = vst [vmem:[#allocation2 + $0x40] sm:$0xff] 0.0
          %481 = vst [vmem:[#allocation2 + $0x48] sm:$0xff] 0.0
          %482 = vst [vmem:[#allocation2 + $0x50] sm:$0xff] 0.0
          %483 = vst [vmem:[#allocation2 + $0x58] sm:$0xff] 0.0
          %484 = vst [vmem:[#allocation2 + $0x60] sm:$0xff] 0.0
          %485 = vst [vmem:[#allocation2 + $0x68] sm:$0xff] 0.0
          %486 = vst [vmem:[#allocation2 + $0x70] sm:$0xff] 0.0
          %487 = vst [vmem:[#allocation2 + $0x78] sm:$0xff] 0.0
          %488 = vst [vmem:[#allocation2 + $0x80] sm:$0xff] 0.0
          %489 = vst [vmem:[#allocation2 + $0x88] sm:$0xff] 0.0
          %490 = vst [vmem:[#allocation2 + $0x90] sm:$0xff] 0.0
          %491 = vst [vmem:[#allocation2 + $0x98] sm:$0xff] 0.0
          %492 = vst [vmem:[#allocation2 + $0xa0] sm:$0xff] 0.0
          %493 = vst [vmem:[#allocation2 + $0xa8] sm:$0xff] 0.0
          %494 = vst [vmem:[#allocation2 + $0xb0] sm:$0xff] 0.0
          %495 = vst [vmem:[#allocation2 + $0xb8] sm:$0xff] 0.0
          %496 = vst [vmem:[#allocation2 + $0xc0] sm:$0xff] 0.0
          %497 = vst [vmem:[#allocation2 + $0xc8] sm:$0xff] 0.0
          %498 = vst [vmem:[#allocation2 + $0xd0] sm:$0xff] 0.0
          %499 = vst [vmem:[#allocation2 + $0xd8] sm:$0xff] 0.0
          %500 = vst [vmem:[#allocation2 + $0xe0] sm:$0xff] 0.0
          %501 = vst [vmem:[#allocation2 + $0xe8] sm:$0xff] 0.0
          %502 = vst [vmem:[#allocation2 + $0xf0] sm:$0xff] 0.0
          %503 = vst [vmem:[#allocation2 + $0xf8] sm:$0xff] 0.0
          %vm504 = vcmask 64512
          %505 = vst.msk [vmem:[#allocation3] sm:$0xff] %vm504, 0.0
          %506 = vst.msk [vmem:[#allocation3 + $0x8] sm:$0xff] %vm504, 0.0
          %507 = vst.msk [vmem:[#allocation3 + $0x10] sm:$0xff] %vm504, 0.0
          %508 = vst.msk [vmem:[#allocation3 + $0x18] sm:$0xff] %vm504, 0.0
          %509 = vst.msk [vmem:[#allocation3 + $0x20] sm:$0xff] %vm504, 0.0
          %510 = vst.msk [vmem:[#allocation3 + $0x28] sm:$0xff] %vm504, 0.0
          %511 = vst.msk [vmem:[#allocation3 + $0x30] sm:$0xff] %vm504, 0.0
          %512 = vst.msk [vmem:[#allocation3 + $0x38] sm:$0xff] %vm504, 0.0
          %513 = vst.msk [vmem:[#allocation3 + $0x40] sm:$0xff] %vm504, 0.0
          %514 = vst.msk [vmem:[#allocation3 + $0x48] sm:$0xff] %vm504, 0.0
          %515 = vst.msk [vmem:[#allocation3 + $0x50] sm:$0xff] %vm504, 0.0
          %516 = vst.msk [vmem:[#allocation3 + $0x58] sm:$0xff] %vm504, 0.0
          %517 = vst.msk [vmem:[#allocation3 + $0x60] sm:$0xff] %vm504, 0.0
          %518 = vst.msk [vmem:[#allocation3 + $0x68] sm:$0xff] %vm504, 0.0
          %519 = vst.msk [vmem:[#allocation3 + $0x70] sm:$0xff] %vm504, 0.0
          %520 = vst.msk [vmem:[#allocation3 + $0x78] sm:$0xff] %vm504, 0.0
        $region75: #{tpu_custom_call.1} parent=58 // pred_fallthru
          _
        %v521 = vld [vmem:[%s384] sm:$0xff]
        %v522 = vld [vmem:[%s384 + $0x8] sm:$0xff]
        %v523 = vld [vmem:[%s384 + $0x10] sm:$0xff]
        %v524 = vld [vmem:[%s384 + $0x18] sm:$0xff]
        %v525 = vld [vmem:[%s384 + $0x20] sm:$0xff]
        %v526 = vld [vmem:[%s384 + $0x28] sm:$0xff]
        %v527 = vld [vmem:[%s384 + $0x30] sm:$0xff]
        %v528 = vld [vmem:[%s384 + $0x38] sm:$0xff]
        %v529 = vld [vmem:[%s384 + $0x40] sm:$0xff]
        %v530 = vld [vmem:[%s384 + $0x48] sm:$0xff]
        %v531 = vld [vmem:[%s384 + $0x50] sm:$0xff]
        %v532 = vld [vmem:[%s384 + $0x58] sm:$0xff]
        %v533 = vld [vmem:[%s384 + $0x60] sm:$0xff]
        %v534 = vld [vmem:[%s384 + $0x68] sm:$0xff]
        %v535 = vld [vmem:[%s384 + $0x70] sm:$0xff]
        %v536 = vld [vmem:[%s384 + $0x78] sm:$0xff]
        %v537 = vld [vmem:[%s384 + $0x80] sm:$0xff]
        %v538 = vld [vmem:[%s384 + $0x88] sm:$0xff]
        %v539 = vld [vmem:[%s384 + $0x90] sm:$0xff]
        %v540 = vld [vmem:[%s384 + $0x98] sm:$0xff]
        %v541 = vld [vmem:[%s384 + $0xa0] sm:$0xff]
        %v542 = vld [vmem:[%s384 + $0xa8] sm:$0xff]
        %v543 = vld [vmem:[%s384 + $0xb0] sm:$0xff]
        %v544 = vld [vmem:[%s384 + $0xb8] sm:$0xff]
        %v545 = vld [vmem:[%s384 + $0xc0] sm:$0xff]
        %v546 = vld [vmem:[%s384 + $0xc8] sm:$0xff]
        %v547 = vld [vmem:[%s384 + $0xd0] sm:$0xff]
        %v548 = vld [vmem:[%s384 + $0xd8] sm:$0xff]
        %v549 = vld [vmem:[%s384 + $0xe0] sm:$0xff]
        %v550 = vld [vmem:[%s384 + $0xe8] sm:$0xff]
        %v551 = vld [vmem:[%s384 + $0xf0] sm:$0xff]
        %v552 = vld [vmem:[%s384 + $0xf8] sm:$0xff]
        %v553 = vld [vmem:[#allocation2] sm:$0xff]
        %v554 = vld [vmem:[#allocation2 + $0x8] sm:$0xff]
        %v555 = vld [vmem:[#allocation2 + $0x10] sm:$0xff]
        %v556 = vld [vmem:[#allocation2 + $0x18] sm:$0xff]
        %v557 = vld [vmem:[#allocation2 + $0x20] sm:$0xff]
        %v558 = vld [vmem:[#allocation2 + $0x28] sm:$0xff]
        %v559 = vld [vmem:[#allocation2 + $0x30] sm:$0xff]
        %v560 = vld [vmem:[#allocation2 + $0x38] sm:$0xff]
        %v561 = vld [vmem:[#allocation2 + $0x40] sm:$0xff]
        %v562 = vld [vmem:[#allocation2 + $0x48] sm:$0xff]
        %v563 = vld [vmem:[#allocation2 + $0x50] sm:$0xff]
        %v564 = vld [vmem:[#allocation2 + $0x58] sm:$0xff]
        %v565 = vld [vmem:[#allocation2 + $0x60] sm:$0xff]
        %v566 = vld [vmem:[#allocation2 + $0x68] sm:$0xff]
        %v567 = vld [vmem:[#allocation2 + $0x70] sm:$0xff]
        %v568 = vld [vmem:[#allocation2 + $0x78] sm:$0xff]
        %v569 = vld [vmem:[#allocation2 + $0x80] sm:$0xff]
        %v570 = vld [vmem:[#allocation2 + $0x88] sm:$0xff]
        %v571 = vld [vmem:[#allocation2 + $0x90] sm:$0xff]
        %v572 = vld [vmem:[#allocation2 + $0x98] sm:$0xff]
        %v573 = vld [vmem:[#allocation2 + $0xa0] sm:$0xff]
        %v574 = vld [vmem:[#allocation2 + $0xa8] sm:$0xff]
        %v575 = vld [vmem:[#allocation2 + $0xb0] sm:$0xff]
        %v576 = vld [vmem:[#allocation2 + $0xb8] sm:$0xff]
        %v577 = vld [vmem:[#allocation2 + $0xc0] sm:$0xff]
        %v578 = vld [vmem:[#allocation2 + $0xc8] sm:$0xff]
        %v579 = vld [vmem:[#allocation2 + $0xd0] sm:$0xff]
        %v580 = vld [vmem:[#allocation2 + $0xd8] sm:$0xff]
        %v581 = vld [vmem:[#allocation2 + $0xe0] sm:$0xff]
        %v582 = vld [vmem:[#allocation2 + $0xe8] sm:$0xff]
        %v583 = vld [vmem:[#allocation2 + $0xf0] sm:$0xff]
        %v584 = vld [vmem:[#allocation2 + $0xf8] sm:$0xff]
        %v585 = vld [vmem:[%s392] sm:$0xff]
        %v586 = vld [vmem:[%s392 + $0x8] sm:$0xff]
        %v587 = vld [vmem:[%s392 + $0x10] sm:$0xff]
        %v588 = vld [vmem:[%s392 + $0x18] sm:$0xff]
        %v589 = vld [vmem:[%s392 + $0x20] sm:$0xff]
        %v590 = vld [vmem:[%s392 + $0x28] sm:$0xff]
        %v591 = vld [vmem:[%s392 + $0x30] sm:$0xff]
        %v592 = vld [vmem:[%s392 + $0x38] sm:$0xff]
        %v593 = vld [vmem:[%s392 + $0x40] sm:$0xff]
        %v594 = vld [vmem:[%s392 + $0x48] sm:$0xff]
        %v595 = vld [vmem:[%s392 + $0x50] sm:$0xff]
        %v596 = vld [vmem:[%s392 + $0x58] sm:$0xff]
        %v597 = vld [vmem:[%s392 + $0x60] sm:$0xff]
        %v598 = vld [vmem:[%s392 + $0x68] sm:$0xff]
        %v599 = vld [vmem:[%s392 + $0x70] sm:$0xff]
        %v600 = vld [vmem:[%s392 + $0x78] sm:$0xff]
        %v601 = vld [vmem:[%s392 + $0x80] sm:$0xff]
        %v602 = vld [vmem:[%s392 + $0x88] sm:$0xff]
        %v603 = vld [vmem:[%s392 + $0x90] sm:$0xff]
        %v604 = vld [vmem:[%s392 + $0x98] sm:$0xff]
        %v605 = vld [vmem:[%s392 + $0xa0] sm:$0xff]
        %v606 = vld [vmem:[%s392 + $0xa8] sm:$0xff]
        %v607 = vld [vmem:[%s392 + $0xb0] sm:$0xff]
        %v608 = vld [vmem:[%s392 + $0xb8] sm:$0xff]
        %v609 = vld [vmem:[%s392 + $0xc0] sm:$0xff]
        %v610 = vld [vmem:[%s392 + $0xc8] sm:$0xff]
        %v611 = vld [vmem:[%s392 + $0xd0] sm:$0xff]
        %v612 = vld [vmem:[%s392 + $0xd8] sm:$0xff]
        %v613 = vld [vmem:[%s392 + $0xe0] sm:$0xff]
        %v614 = vld [vmem:[%s392 + $0xe8] sm:$0xff]
        %v615 = vld [vmem:[%s392 + $0xf0] sm:$0xff]
        %v616 = vld [vmem:[%s392 + $0xf8] sm:$0xff]
        %v617 = vld [vmem:[%s392 + $0x100] sm:$0xff]
        %v618 = vld [vmem:[%s392 + $0x108] sm:$0xff]
        %v619 = vld [vmem:[%s392 + $0x110] sm:$0xff]
        %v620 = vld [vmem:[%s392 + $0x118] sm:$0xff]
        %v621 = vld [vmem:[%s392 + $0x120] sm:$0xff]
        %v622 = vld [vmem:[%s392 + $0x128] sm:$0xff]
        %v623 = vld [vmem:[%s392 + $0x130] sm:$0xff]
        %v624 = vld [vmem:[%s392 + $0x138] sm:$0xff]
        %v625 = vld [vmem:[%s392 + $0x140] sm:$0xff]
        %v626 = vld [vmem:[%s392 + $0x148] sm:$0xff]
        %v627 = vld [vmem:[%s392 + $0x150] sm:$0xff]
        %v628 = vld [vmem:[%s392 + $0x158] sm:$0xff]
        %v629 = vld [vmem:[%s392 + $0x160] sm:$0xff]
        %v630 = vld [vmem:[%s392 + $0x168] sm:$0xff]
        %v631 = vld [vmem:[%s392 + $0x170] sm:$0xff]
        %v632 = vld [vmem:[%s392 + $0x178] sm:$0xff]
        %v633 = vld [vmem:[%s392 + $0x180] sm:$0xff]
        %v634 = vld [vmem:[%s392 + $0x188] sm:$0xff]
        %v635 = vld [vmem:[%s392 + $0x190] sm:$0xff]
        %v636 = vld [vmem:[%s392 + $0x198] sm:$0xff]
        %v637 = vld [vmem:[%s392 + $0x1a0] sm:$0xff]
        %v638 = vld [vmem:[%s392 + $0x1a8] sm:$0xff]
        %v639 = vld [vmem:[%s392 + $0x1b0] sm:$0xff]
        %v640 = vld [vmem:[%s392 + $0x1b8] sm:$0xff]
        %v641 = vld [vmem:[%s392 + $0x1c0] sm:$0xff]
        %v642 = vld [vmem:[%s392 + $0x1c8] sm:$0xff]
        %v643 = vld [vmem:[%s392 + $0x1d0] sm:$0xff]
        %v644 = vld [vmem:[%s392 + $0x1d8] sm:$0xff]
        %v645 = vld [vmem:[%s392 + $0x1e0] sm:$0xff]
        %v646 = vld [vmem:[%s392 + $0x1e8] sm:$0xff]
        %v647 = vld [vmem:[%s392 + $0x1f0] sm:$0xff]
        %v648 = vld [vmem:[%s392 + $0x1f8] sm:$0xff]
        %649 = vmatpush.msra.mxu0 %v615
        %650 = vmatpush.msra.mxu0 %v613
        %651 = vmatpush.msra.mxu0 %v611
        %652 = vmatpush.msra.mxu0 %v609
        %653 = vmatpush.msra.mxu0 %v607
        %654 = vmatpush.msra.mxu0 %v605
        %655 = vmatpush.msra.mxu0 %v603
        %656 = vmatpush.msra.mxu0 %v601
        %657 = vmatpush.msra.mxu0 %v599
        %658 = vmatpush.msra.mxu0 %v597
        %659 = vmatpush.msra.mxu0 %v595
        %660 = vmatpush.msra.mxu0 %v593
        %661 = vmatpush.msra.mxu0 %v591
        %662 = vmatpush.msra.mxu0 %v589
        %663 = vmatpush.msra.mxu0 %v587
        %664 = vmatpush.msra.mxu0 %v585
        %665 = vmatmul.f32.gmra.mxu0 %v521
        %v666 = vpop.f32.mrf.mxu0
        %v667 = vadd.f32 0.0, %v666
        %668 = vmatmul.f32.gmra.mxu0 %v523
        %v669 = vpop.f32.mrf.mxu0
        %v670 = vadd.f32 0.0, %v669
        %671 = vmatmul.f32.gmra.mxu0 %v525
        %v672 = vpop.f32.mrf.mxu0
        %v673 = vadd.f32 0.0, %v672
        %674 = vmatmul.f32.gmra.mxu0 %v527
        %v675 = vpop.f32.mrf.mxu0
        %v676 = vadd.f32 0.0, %v675
        %677 = vmatmul.f32.gmra.mxu0 %v529
        %v678 = vpop.f32.mrf.mxu0
        %v679 = vadd.f32 0.0, %v678
        %680 = vmatmul.f32.gmra.mxu0 %v531
        %v681 = vpop.f32.mrf.mxu0
        %v682 = vadd.f32 0.0, %v681
        %683 = vmatmul.f32.gmra.mxu0 %v533
        %v684 = vpop.f32.mrf.mxu0
        %v685 = vadd.f32 0.0, %v684
        %686 = vmatmul.f32.gmra.mxu0 %v535
        %v687 = vpop.f32.mrf.mxu0
        %v688 = vadd.f32 0.0, %v687
        %689 = vmatmul.f32.gmra.mxu0 %v537
        %v690 = vpop.f32.mrf.mxu0
        %v691 = vadd.f32 0.0, %v690
        %692 = vmatmul.f32.gmra.mxu0 %v539
        %v693 = vpop.f32.mrf.mxu0
        %v694 = vadd.f32 0.0, %v693
        %695 = vmatmul.f32.gmra.mxu0 %v541
        %v696 = vpop.f32.mrf.mxu0
        %v697 = vadd.f32 0.0, %v696
        %698 = vmatmul.f32.gmra.mxu0 %v543
        %v699 = vpop.f32.mrf.mxu0
        %v700 = vadd.f32 0.0, %v699
        %701 = vmatmul.f32.gmra.mxu0 %v545
        %v702 = vpop.f32.mrf.mxu0
        %v703 = vadd.f32 0.0, %v702
        %704 = vmatmul.f32.gmra.mxu0 %v547
        %v705 = vpop.f32.mrf.mxu0
        %v706 = vadd.f32 0.0, %v705
        %707 = vmatmul.f32.gmra.mxu0 %v549
        %v708 = vpop.f32.mrf.mxu0
        %v709 = vadd.f32 0.0, %v708
        %710 = vmatmul.f32.gmra.mxu0 %v551
        %v711 = vpop.f32.mrf.mxu0
        %v712 = vadd.f32 0.0, %v711
        %713 = vdwg.mxu0
        %714 = vmatpush.msra.mxu0 %v647
        %715 = vmatpush.msra.mxu0 %v645
        %716 = vmatpush.msra.mxu0 %v643
        %717 = vmatpush.msra.mxu0 %v641
        %718 = vmatpush.msra.mxu0 %v639
        %719 = vmatpush.msra.mxu0 %v637
        %720 = vmatpush.msra.mxu0 %v635
        %721 = vmatpush.msra.mxu0 %v633
        %722 = vmatpush.msra.mxu0 %v631
        %723 = vmatpush.msra.mxu0 %v629
        %724 = vmatpush.msra.mxu0 %v627
        %725 = vmatpush.msra.mxu0 %v625
        %726 = vmatpush.msra.mxu0 %v623
        %727 = vmatpush.msra.mxu0 %v621
        %728 = vmatpush.msra.mxu0 %v619
        %729 = vmatpush.msra.mxu0 %v617
        %730 = vmatmul.f32.gmra.mxu0 %v522
        %v731 = vpop.f32.mrf.mxu0
        %v732 = vadd.f32 %v667, %v731
        %733 = vmatmul.f32.gmra.mxu0 %v524
        %v734 = vpop.f32.mrf.mxu0
        %v735 = vadd.f32 %v670, %v734
        %736 = vmatmul.f32.gmra.mxu0 %v526
        %v737 = vpop.f32.mrf.mxu0
        %v738 = vadd.f32 %v673, %v737
        %739 = vmatmul.f32.gmra.mxu0 %v528
        %v740 = vpop.f32.mrf.mxu0
        %v741 = vadd.f32 %v676, %v740
        %742 = vmatmul.f32.gmra.mxu0 %v530
        %v743 = vpop.f32.mrf.mxu0
        %v744 = vadd.f32 %v679, %v743
        %745 = vmatmul.f32.gmra.mxu0 %v532
        %v746 = vpop.f32.mrf.mxu0
        %v747 = vadd.f32 %v682, %v746
        %748 = vmatmul.f32.gmra.mxu0 %v534
        %v749 = vpop.f32.mrf.mxu0
        %v750 = vadd.f32 %v685, %v749
        %751 = vmatmul.f32.gmra.mxu0 %v536
        %v752 = vpop.f32.mrf.mxu0
        %v753 = vadd.f32 %v688, %v752
        %754 = vmatmul.f32.gmra.mxu0 %v538
        %v755 = vpop.f32.mrf.mxu0
        %v756 = vadd.f32 %v691, %v755
        %757 = vmatmul.f32.gmra.mxu0 %v540
        %v758 = vpop.f32.mrf.mxu0
        %v759 = vadd.f32 %v694, %v758
        %760 = vmatmul.f32.gmra.mxu0 %v542
        %v761 = vpop.f32.mrf.mxu0
        %v762 = vadd.f32 %v697, %v761
        %763 = vmatmul.f32.gmra.mxu0 %v544
        %v764 = vpop.f32.mrf.mxu0
        %v765 = vadd.f32 %v700, %v764
        %766 = vmatmul.f32.gmra.mxu0 %v546
        %v767 = vpop.f32.mrf.mxu0
        %v768 = vadd.f32 %v703, %v767
        %769 = vmatmul.f32.gmra.mxu0 %v548
        %v770 = vpop.f32.mrf.mxu0
        %v771 = vadd.f32 %v706, %v770
        %772 = vmatmul.f32.gmra.mxu0 %v550
        %v773 = vpop.f32.mrf.mxu0
        %v774 = vadd.f32 %v709, %v773
        %775 = vmatmul.f32.gmra.mxu0 %v552
        %v776 = vpop.f32.mrf.mxu0
        %v777 = vadd.f32 %v712, %v776
        %778 = vdwg.mxu0
        %779 = vmatpush.msra.mxu0 %v616
        %780 = vmatpush.msra.mxu0 %v614
        %781 = vmatpush.msra.mxu0 %v612
        %782 = vmatpush.msra.mxu0 %v610
        %783 = vmatpush.msra.mxu0 %v608
        %784 = vmatpush.msra.mxu0 %v606
        %785 = vmatpush.msra.mxu0 %v604
        %786 = vmatpush.msra.mxu0 %v602
        %787 = vmatpush.msra.mxu0 %v600
        %788 = vmatpush.msra.mxu0 %v598
        %789 = vmatpush.msra.mxu0 %v596
        %790 = vmatpush.msra.mxu0 %v594
        %791 = vmatpush.msra.mxu0 %v592
        %792 = vmatpush.msra.mxu0 %v590
        %793 = vmatpush.msra.mxu0 %v588
        %794 = vmatpush.msra.mxu0 %v586
        %795 = vmatmul.f32.gmra.mxu0 %v521
        %v796 = vpop.f32.mrf.mxu0
        %v797 = vadd.f32 0.0, %v796
        %798 = vmatmul.f32.gmra.mxu0 %v523
        %v799 = vpop.f32.mrf.mxu0
        %v800 = vadd.f32 0.0, %v799
        %801 = vmatmul.f32.gmra.mxu0 %v525
        %v802 = vpop.f32.mrf.mxu0
        %v803 = vadd.f32 0.0, %v802
        %804 = vmatmul.f32.gmra.mxu0 %v527
        %v805 = vpop.f32.mrf.mxu0
        %v806 = vadd.f32 0.0, %v805
        %807 = vmatmul.f32.gmra.mxu0 %v529
        %v808 = vpop.f32.mrf.mxu0
        %v809 = vadd.f32 0.0, %v808
        %810 = vmatmul.f32.gmra.mxu0 %v531
        %v811 = vpop.f32.mrf.mxu0
        %v812 = vadd.f32 0.0, %v811
        %813 = vmatmul.f32.gmra.mxu0 %v533
        %v814 = vpop.f32.mrf.mxu0
        %v815 = vadd.f32 0.0, %v814
        %816 = vmatmul.f32.gmra.mxu0 %v535
        %v817 = vpop.f32.mrf.mxu0
        %v818 = vadd.f32 0.0, %v817
        %819 = vmatmul.f32.gmra.mxu0 %v537
        %v820 = vpop.f32.mrf.mxu0
        %v821 = vadd.f32 0.0, %v820
        %822 = vmatmul.f32.gmra.mxu0 %v539
        %v823 = vpop.f32.mrf.mxu0
        %v824 = vadd.f32 0.0, %v823
        %825 = vmatmul.f32.gmra.mxu0 %v541
        %v826 = vpop.f32.mrf.mxu0
        %v827 = vadd.f32 0.0, %v826
        %828 = vmatmul.f32.gmra.mxu0 %v543
        %v829 = vpop.f32.mrf.mxu0
        %v830 = vadd.f32 0.0, %v829
        %831 = vmatmul.f32.gmra.mxu0 %v545
        %v832 = vpop.f32.mrf.mxu0
        %v833 = vadd.f32 0.0, %v832
        %834 = vmatmul.f32.gmra.mxu0 %v547
        %v835 = vpop.f32.mrf.mxu0
        %v836 = vadd.f32 0.0, %v835
        %837 = vmatmul.f32.gmra.mxu0 %v549
        %v838 = vpop.f32.mrf.mxu0
        %v839 = vadd.f32 0.0, %v838
        %840 = vmatmul.f32.gmra.mxu0 %v551
        %v841 = vpop.f32.mrf.mxu0
        %v842 = vadd.f32 0.0, %v841
        %843 = vdwg.mxu0
        %844 = vmatpush.msra.mxu0 %v648
        %845 = vmatpush.msra.mxu0 %v646
        %846 = vmatpush.msra.mxu0 %v644
        %847 = vmatpush.msra.mxu0 %v642
        %848 = vmatpush.msra.mxu0 %v640
        %849 = vmatpush.msra.mxu0 %v638
        %850 = vmatpush.msra.mxu0 %v636
        %851 = vmatpush.msra.mxu0 %v634
        %852 = vmatpush.msra.mxu0 %v632
        %853 = vmatpush.msra.mxu0 %v630
        %854 = vmatpush.msra.mxu0 %v628
        %855 = vmatpush.msra.mxu0 %v626
        %856 = vmatpush.msra.mxu0 %v624
        %857 = vmatpush.msra.mxu0 %v622
        %858 = vmatpush.msra.mxu0 %v620
        %859 = vmatpush.msra.mxu0 %v618
        %860 = vmatmul.f32.gmra.mxu0 %v522
        %v861 = vpop.f32.mrf.mxu0
        %v862 = vadd.f32 %v797, %v861
        %863 = vmatmul.f32.gmra.mxu0 %v524
        %v864 = vpop.f32.mrf.mxu0
        %v865 = vadd.f32 %v800, %v864
        %866 = vmatmul.f32.gmra.mxu0 %v526
        %v867 = vpop.f32.mrf.mxu0
        %v868 = vadd.f32 %v803, %v867
        %869 = vmatmul.f32.gmra.mxu0 %v528
        %v870 = vpop.f32.mrf.mxu0
        %v871 = vadd.f32 %v806, %v870
        %872 = vmatmul.f32.gmra.mxu0 %v530
        %v873 = vpop.f32.mrf.mxu0
        %v874 = vadd.f32 %v809, %v873
        %875 = vmatmul.f32.gmra.mxu0 %v532
        %v876 = vpop.f32.mrf.mxu0
        %v877 = vadd.f32 %v812, %v876
        %878 = vmatmul.f32.gmra.mxu0 %v534
        %v879 = vpop.f32.mrf.mxu0
        %v880 = vadd.f32 %v815, %v879
        %881 = vmatmul.f32.gmra.mxu0 %v536
        %v882 = vpop.f32.mrf.mxu0
        %v883 = vadd.f32 %v818, %v882
        %884 = vmatmul.f32.gmra.mxu0 %v538
        %v885 = vpop.f32.mrf.mxu0
        %v886 = vadd.f32 %v821, %v885
        %887 = vmatmul.f32.gmra.mxu0 %v540
        %v888 = vpop.f32.mrf.mxu0
        %v889 = vadd.f32 %v824, %v888
        %890 = vmatmul.f32.gmra.mxu0 %v542
        %v891 = vpop.f32.mrf.mxu0
        %v892 = vadd.f32 %v827, %v891
        %893 = vmatmul.f32.gmra.mxu0 %v544
        %v894 = vpop.f32.mrf.mxu0
        %v895 = vadd.f32 %v830, %v894
        %896 = vmatmul.f32.gmra.mxu0 %v546
        %v897 = vpop.f32.mrf.mxu0
        %v898 = vadd.f32 %v833, %v897
        %899 = vmatmul.f32.gmra.mxu0 %v548
        %v900 = vpop.f32.mrf.mxu0
        %v901 = vadd.f32 %v836, %v900
        %902 = vmatmul.f32.gmra.mxu0 %v550
        %v903 = vpop.f32.mrf.mxu0
        %v904 = vadd.f32 %v839, %v903
        %905 = vmatmul.f32.gmra.mxu0 %v552
        %v906 = vpop.f32.mrf.mxu0
        %v907 = vadd.f32 %v842, %v906
        %908 = vdwg.mxu0
        %v909 = vadd.f32 %v553, %v732
        %v910 = vadd.f32 %v554, %v862
        %v911 = vadd.f32 %v555, %v735
        %v912 = vadd.f32 %v556, %v865
        %v913 = vadd.f32 %v557, %v738
        %v914 = vadd.f32 %v558, %v868
        %v915 = vadd.f32 %v559, %v741
        %v916 = vadd.f32 %v560, %v871
        %v917 = vadd.f32 %v561, %v744
        %v918 = vadd.f32 %v562, %v874
        %v919 = vadd.f32 %v563, %v747
        %v920 = vadd.f32 %v564, %v877
        %v921 = vadd.f32 %v565, %v750
        %v922 = vadd.f32 %v566, %v880
        %v923 = vadd.f32 %v567, %v753
        %v924 = vadd.f32 %v568, %v883
        %v925 = vadd.f32 %v569, %v756
        %v926 = vadd.f32 %v570, %v886
        %v927 = vadd.f32 %v571, %v759
        %v928 = vadd.f32 %v572, %v889
        %v929 = vadd.f32 %v573, %v762
        %v930 = vadd.f32 %v574, %v892
        %v931 = vadd.f32 %v575, %v765
        %v932 = vadd.f32 %v576, %v895
        %v933 = vadd.f32 %v577, %v768
        %v934 = vadd.f32 %v578, %v898
        %v935 = vadd.f32 %v579, %v771
        %v936 = vadd.f32 %v580, %v901
        %v937 = vadd.f32 %v581, %v774
        %v938 = vadd.f32 %v582, %v904
        %v939 = vadd.f32 %v583, %v777
        %v940 = vadd.f32 %v584, %v907
        %941 = vst [vmem:[#allocation2] sm:$0xff] %v909
        %942 = vst [vmem:[#allocation2 + $0x8] sm:$0xff] %v910
        %943 = vst [vmem:[#allocation2 + $0x10] sm:$0xff] %v911
        %944 = vst [vmem:[#allocation2 + $0x18] sm:$0xff] %v912
        %945 = vst [vmem:[#allocation2 + $0x20] sm:$0xff] %v913
        %946 = vst [vmem:[#allocation2 + $0x28] sm:$0xff] %v914
        %947 = vst [vmem:[#allocation2 + $0x30] sm:$0xff] %v915
        %948 = vst [vmem:[#allocation2 + $0x38] sm:$0xff] %v916
        %949 = vst [vmem:[#allocation2 + $0x40] sm:$0xff] %v917
        %950 = vst [vmem:[#allocation2 + $0x48] sm:$0xff] %v918
        %951 = vst [vmem:[#allocation2 + $0x50] sm:$0xff] %v919
        %952 = vst [vmem:[#allocation2 + $0x58] sm:$0xff] %v920
        %953 = vst [vmem:[#allocation2 + $0x60] sm:$0xff] %v921
        %954 = vst [vmem:[#allocation2 + $0x68] sm:$0xff] %v922
        %955 = vst [vmem:[#allocation2 + $0x70] sm:$0xff] %v923
        %956 = vst [vmem:[#allocation2 + $0x78] sm:$0xff] %v924
        %957 = vst [vmem:[#allocation2 + $0x80] sm:$0xff] %v925
        %958 = vst [vmem:[#allocation2 + $0x88] sm:$0xff] %v926
        %959 = vst [vmem:[#allocation2 + $0x90] sm:$0xff] %v927
        %960 = vst [vmem:[#allocation2 + $0x98] sm:$0xff] %v928
        %961 = vst [vmem:[#allocation2 + $0xa0] sm:$0xff] %v929
        %962 = vst [vmem:[#allocation2 + $0xa8] sm:$0xff] %v930
        %963 = vst [vmem:[#allocation2 + $0xb0] sm:$0xff] %v931
        %964 = vst [vmem:[#allocation2 + $0xb8] sm:$0xff] %v932
        %965 = vst [vmem:[#allocation2 + $0xc0] sm:$0xff] %v933
        %966 = vst [vmem:[#allocation2 + $0xc8] sm:$0xff] %v934
        %967 = vst [vmem:[#allocation2 + $0xd0] sm:$0xff] %v935
        %968 = vst [vmem:[#allocation2 + $0xd8] sm:$0xff] %v936
        %969 = vst [vmem:[#allocation2 + $0xe0] sm:$0xff] %v937
        %970 = vst [vmem:[#allocation2 + $0xe8] sm:$0xff] %v938
        %971 = vst [vmem:[#allocation2 + $0xf0] sm:$0xff] %v939
        %972 = vst [vmem:[#allocation2 + $0xf8] sm:$0xff] %v940
        %v973 = vld [vmem:[#allocation3] sm:$0xff]
        %v974 = vld [vmem:[#allocation3 + $0x8] sm:$0xff]
        %v975 = vld [vmem:[#allocation3 + $0x10] sm:$0xff]
        %v976 = vld [vmem:[#allocation3 + $0x18] sm:$0xff]
        %v977 = vld [vmem:[#allocation3 + $0x20] sm:$0xff]
        %v978 = vld [vmem:[#allocation3 + $0x28] sm:$0xff]
        %v979 = vld [vmem:[#allocation3 + $0x30] sm:$0xff]
        %v980 = vld [vmem:[#allocation3 + $0x38] sm:$0xff]
        %v981 = vld [vmem:[#allocation3 + $0x40] sm:$0xff]
        %v982 = vld [vmem:[#allocation3 + $0x48] sm:$0xff]
        %v983 = vld [vmem:[#allocation3 + $0x50] sm:$0xff]
        %v984 = vld [vmem:[#allocation3 + $0x58] sm:$0xff]
        %v985 = vld [vmem:[#allocation3 + $0x60] sm:$0xff]
        %v986 = vld [vmem:[#allocation3 + $0x68] sm:$0xff]
        %v987 = vld [vmem:[#allocation3 + $0x70] sm:$0xff]
        %v988 = vld [vmem:[#allocation3 + $0x78] sm:$0xff]
        %v989 = vld [vmem:[%s458] sm:$0xff]
        %v990 = vld [vmem:[%s458 + $0x8] sm:$0xff]
        %v991 = vld [vmem:[%s458 + $0x10] sm:$0xff]
        %v992 = vld [vmem:[%s458 + $0x18] sm:$0xff]
        %v993 = vld [vmem:[%s458 + $0x20] sm:$0xff]
        %v994 = vld [vmem:[%s458 + $0x28] sm:$0xff]
        %v995 = vld [vmem:[%s458 + $0x30] sm:$0xff]
        %v996 = vld [vmem:[%s458 + $0x38] sm:$0xff]
        %v997 = vld [vmem:[%s458 + $0x40] sm:$0xff]
        %v998 = vld [vmem:[%s458 + $0x48] sm:$0xff]
        %v999 = vld [vmem:[%s458 + $0x50] sm:$0xff]
        %v1000 = vld [vmem:[%s458 + $0x58] sm:$0xff]
        %v1001 = vld [vmem:[%s458 + $0x60] sm:$0xff]
        %v1002 = vld [vmem:[%s458 + $0x68] sm:$0xff]
        %v1003 = vld [vmem:[%s458 + $0x70] sm:$0xff]
        %v1004 = vld [vmem:[%s458 + $0x78] sm:$0xff]
        %v1005 = vld [vmem:[%s458 + $0x80] sm:$0xff]
        %v1006 = vld [vmem:[%s458 + $0x88] sm:$0xff]
        %v1007 = vld [vmem:[%s458 + $0x90] sm:$0xff]
        %v1008 = vld [vmem:[%s458 + $0x98] sm:$0xff]
        %v1009 = vld [vmem:[%s458 + $0xa0] sm:$0xff]
        %v1010 = vld [vmem:[%s458 + $0xa8] sm:$0xff]
        %v1011 = vld [vmem:[%s458 + $0xb0] sm:$0xff]
        %v1012 = vld [vmem:[%s458 + $0xb8] sm:$0xff]
        %v1013 = vld [vmem:[%s458 + $0xc0] sm:$0xff]
        %v1014 = vld [vmem:[%s458 + $0xc8] sm:$0xff]
        %v1015 = vld [vmem:[%s458 + $0xd0] sm:$0xff]
        %v1016 = vld [vmem:[%s458 + $0xd8] sm:$0xff]
        %v1017 = vld [vmem:[%s458 + $0xe0] sm:$0xff]
        %v1018 = vld [vmem:[%s458 + $0xe8] sm:$0xff]
        %v1019 = vld [vmem:[%s458 + $0xf0] sm:$0xff]
        %v1020 = vld [vmem:[%s458 + $0xf8] sm:$0xff]
        %1021 = vmatpush.msra.mxu0 %v1004
        %1022 = vmatpush.msra.mxu0 %v1003
        %1023 = vmatpush.msra.mxu0 %v1002
        %1024 = vmatpush.msra.mxu0 %v1001
        %1025 = vmatpush.msra.mxu0 %v1000
        %1026 = vmatpush.msra.mxu0 %v999
        %1027 = vmatpush.msra.mxu0 %v998
        %1028 = vmatpush.msra.mxu0 %v997
        %1029 = vmatpush.msra.mxu0 %v996
        %1030 = vmatpush.msra.mxu0 %v995
        %1031 = vmatpush.msra.mxu0 %v994
        %1032 = vmatpush.msra.mxu0 %v993
        %1033 = vmatpush.msra.mxu0 %v992
        %1034 = vmatpush.msra.mxu0 %v991
        %1035 = vmatpush.msra.mxu0 %v990
        %1036 = vmatpush.msra.mxu0 %v989
        %1037 = vmatmul.f32.gmra.mxu0 %v521
        %v1038 = vpop.f32.mrf.mxu0
        %v1039 = vadd.f32 0.0, %v1038
        %1040 = vmatmul.f32.gmra.mxu0 %v523
        %v1041 = vpop.f32.mrf.mxu0
        %v1042 = vadd.f32 0.0, %v1041
        %1043 = vmatmul.f32.gmra.mxu0 %v525
        %v1044 = vpop.f32.mrf.mxu0
        %v1045 = vadd.f32 0.0, %v1044
        %1046 = vmatmul.f32.gmra.mxu0 %v527
        %v1047 = vpop.f32.mrf.mxu0
        %v1048 = vadd.f32 0.0, %v1047
        %1049 = vmatmul.f32.gmra.mxu0 %v529
        %v1050 = vpop.f32.mrf.mxu0
        %v1051 = vadd.f32 0.0, %v1050
        %1052 = vmatmul.f32.gmra.mxu0 %v531
        %v1053 = vpop.f32.mrf.mxu0
        %v1054 = vadd.f32 0.0, %v1053
        %1055 = vmatmul.f32.gmra.mxu0 %v533
        %v1056 = vpop.f32.mrf.mxu0
        %v1057 = vadd.f32 0.0, %v1056
        %1058 = vmatmul.f32.gmra.mxu0 %v535
        %v1059 = vpop.f32.mrf.mxu0
        %v1060 = vadd.f32 0.0, %v1059
        %1061 = vmatmul.f32.gmra.mxu0 %v537
        %v1062 = vpop.f32.mrf.mxu0
        %v1063 = vadd.f32 0.0, %v1062
        %1064 = vmatmul.f32.gmra.mxu0 %v539
        %v1065 = vpop.f32.mrf.mxu0
        %v1066 = vadd.f32 0.0, %v1065
        %1067 = vmatmul.f32.gmra.mxu0 %v541
        %v1068 = vpop.f32.mrf.mxu0
        %v1069 = vadd.f32 0.0, %v1068
        %1070 = vmatmul.f32.gmra.mxu0 %v543
        %v1071 = vpop.f32.mrf.mxu0
        %v1072 = vadd.f32 0.0, %v1071
        %1073 = vmatmul.f32.gmra.mxu0 %v545
        %v1074 = vpop.f32.mrf.mxu0
        %v1075 = vadd.f32 0.0, %v1074
        %1076 = vmatmul.f32.gmra.mxu0 %v547
        %v1077 = vpop.f32.mrf.mxu0
        %v1078 = vadd.f32 0.0, %v1077
        %1079 = vmatmul.f32.gmra.mxu0 %v549
        %v1080 = vpop.f32.mrf.mxu0
        %v1081 = vadd.f32 0.0, %v1080
        %1082 = vmatmul.f32.gmra.mxu0 %v551
        %v1083 = vpop.f32.mrf.mxu0
        %v1084 = vadd.f32 0.0, %v1083
        %1085 = vdwg.mxu0
        %1086 = vmatpush.msra.mxu0 %v1020
        %1087 = vmatpush.msra.mxu0 %v1019
        %1088 = vmatpush.msra.mxu0 %v1018
        %1089 = vmatpush.msra.mxu0 %v1017
        %1090 = vmatpush.msra.mxu0 %v1016
        %1091 = vmatpush.msra.mxu0 %v1015
        %1092 = vmatpush.msra.mxu0 %v1014
        %1093 = vmatpush.msra.mxu0 %v1013
        %1094 = vmatpush.msra.mxu0 %v1012
        %1095 = vmatpush.msra.mxu0 %v1011
        %1096 = vmatpush.msra.mxu0 %v1010
        %1097 = vmatpush.msra.mxu0 %v1009
        %1098 = vmatpush.msra.mxu0 %v1008
        %1099 = vmatpush.msra.mxu0 %v1007
        %1100 = vmatpush.msra.mxu0 %v1006
        %1101 = vmatpush.msra.mxu0 %v1005
        %1102 = vmatmul.f32.gmra.mxu0 %v522
        %v1103 = vpop.f32.mrf.mxu0
        %v1104 = vadd.f32 %v1039, %v1103
        %1105 = vmatmul.f32.gmra.mxu0 %v524
        %v1106 = vpop.f32.mrf.mxu0
        %v1107 = vadd.f32 %v1042, %v1106
        %1108 = vmatmul.f32.gmra.mxu0 %v526
        %v1109 = vpop.f32.mrf.mxu0
        %v1110 = vadd.f32 %v1045, %v1109
        %1111 = vmatmul.f32.gmra.mxu0 %v528
        %v1112 = vpop.f32.mrf.mxu0
        %v1113 = vadd.f32 %v1048, %v1112
        %1114 = vmatmul.f32.gmra.mxu0 %v530
        %v1115 = vpop.f32.mrf.mxu0
        %v1116 = vadd.f32 %v1051, %v1115
        %1117 = vmatmul.f32.gmra.mxu0 %v532
        %v1118 = vpop.f32.mrf.mxu0
        %v1119 = vadd.f32 %v1054, %v1118
        %1120 = vmatmul.f32.gmra.mxu0 %v534
        %v1121 = vpop.f32.mrf.mxu0
        %v1122 = vadd.f32 %v1057, %v1121
        %1123 = vmatmul.f32.gmra.mxu0 %v536
        %v1124 = vpop.f32.mrf.mxu0
        %v1125 = vadd.f32 %v1060, %v1124
        %1126 = vmatmul.f32.gmra.mxu0 %v538
        %v1127 = vpop.f32.mrf.mxu0
        %v1128 = vadd.f32 %v1063, %v1127
        %1129 = vmatmul.f32.gmra.mxu0 %v540
        %v1130 = vpop.f32.mrf.mxu0
        %v1131 = vadd.f32 %v1066, %v1130
        %1132 = vmatmul.f32.gmra.mxu0 %v542
        %v1133 = vpop.f32.mrf.mxu0
        %v1134 = vadd.f32 %v1069, %v1133
        %1135 = vmatmul.f32.gmra.mxu0 %v544
        %v1136 = vpop.f32.mrf.mxu0
        %v1137 = vadd.f32 %v1072, %v1136
        %1138 = vmatmul.f32.gmra.mxu0 %v546
        %v1139 = vpop.f32.mrf.mxu0
        %v1140 = vadd.f32 %v1075, %v1139
        %1141 = vmatmul.f32.gmra.mxu0 %v548
        %v1142 = vpop.f32.mrf.mxu0
        %v1143 = vadd.f32 %v1078, %v1142
        %1144 = vmatmul.f32.gmra.mxu0 %v550
        %v1145 = vpop.f32.mrf.mxu0
        %v1146 = vadd.f32 %v1081, %v1145
        %1147 = vmatmul.f32.gmra.mxu0 %v552
        %v1148 = vpop.f32.mrf.mxu0
        %v1149 = vadd.f32 %v1084, %v1148
        %1150 = vdwg.mxu0
        %v1151 = vadd.f32 %v973, %v1104
        %v1152 = vadd.f32 %v974, %v1107
        %v1153 = vadd.f32 %v975, %v1110
        %v1154 = vadd.f32 %v976, %v1113
        %v1155 = vadd.f32 %v977, %v1116
        %v1156 = vadd.f32 %v978, %v1119
        %v1157 = vadd.f32 %v979, %v1122
        %v1158 = vadd.f32 %v980, %v1125
        %v1159 = vadd.f32 %v981, %v1128
        %v1160 = vadd.f32 %v982, %v1131
        %v1161 = vadd.f32 %v983, %v1134
        %v1162 = vadd.f32 %v984, %v1137
        %v1163 = vadd.f32 %v985, %v1140
        %v1164 = vadd.f32 %v986, %v1143
        %v1165 = vadd.f32 %v987, %v1146
        %v1166 = vadd.f32 %v988, %v1149
        %vm1167 = vcmask 64512
        %1168 = vst.msk [vmem:[#allocation3] sm:$0xff] %vm1167, %v1151
        %1169 = vst.msk [vmem:[#allocation3 + $0x8] sm:$0xff] %vm1167, %v1152
        %1170 = vst.msk [vmem:[#allocation3 + $0x10] sm:$0xff] %vm1167, %v1153
        %1171 = vst.msk [vmem:[#allocation3 + $0x18] sm:$0xff] %vm1167, %v1154
        %1172 = vst.msk [vmem:[#allocation3 + $0x20] sm:$0xff] %vm1167, %v1155
        %1173 = vst.msk [vmem:[#allocation3 + $0x28] sm:$0xff] %vm1167, %v1156
        %1174 = vst.msk [vmem:[#allocation3 + $0x30] sm:$0xff] %vm1167, %v1157
        %1175 = vst.msk [vmem:[#allocation3 + $0x38] sm:$0xff] %vm1167, %v1158
        %1176 = vst.msk [vmem:[#allocation3 + $0x40] sm:$0xff] %vm1167, %v1159
        %1177 = vst.msk [vmem:[#allocation3 + $0x48] sm:$0xff] %vm1167, %v1160
        %1178 = vst.msk [vmem:[#allocation3 + $0x50] sm:$0xff] %vm1167, %v1161
        %1179 = vst.msk [vmem:[#allocation3 + $0x58] sm:$0xff] %vm1167, %v1162
        %1180 = vst.msk [vmem:[#allocation3 + $0x60] sm:$0xff] %vm1167, %v1163
        %1181 = vst.msk [vmem:[#allocation3 + $0x68] sm:$0xff] %vm1167, %v1164
        %1182 = vst.msk [vmem:[#allocation3 + $0x70] sm:$0xff] %vm1167, %v1165
        %1183 = vst.msk [vmem:[#allocation3 + $0x78] sm:$0xff] %vm1167, %v1166
        %p1184 = scmp.eq.s32.totalorder %s32, 1
        // Predicated region
        $region76: #{tpu_custom_call.1} parent=58 // pred_check
          %p1185 = pneg %p1184
        $region77: #{tpu_custom_call.1} parent=58 // pred_check_branch
          %1187 = sbr.rel (%p1185) target = $region79
        $region78: #{tpu_custom_call.1} parent=58 // pred_region
          %v1188 = vld [vmem:[#allocation3] sm:$0xff]
          %v1189 = vld [vmem:[#allocation3 + $0x8] sm:$0xff]
          %v1190 = vld [vmem:[#allocation3 + $0x10] sm:$0xff]
          %v1191 = vld [vmem:[#allocation3 + $0x18] sm:$0xff]
          %v1192 = vld [vmem:[#allocation3 + $0x20] sm:$0xff]
          %v1193 = vld [vmem:[#allocation3 + $0x28] sm:$0xff]
          %v1194 = vld [vmem:[#allocation3 + $0x30] sm:$0xff]
          %v1195 = vld [vmem:[#allocation3 + $0x38] sm:$0xff]
          %v1196 = vld [vmem:[#allocation3 + $0x40] sm:$0xff]
          %v1197 = vld [vmem:[#allocation3 + $0x48] sm:$0xff]
          %v1198 = vld [vmem:[#allocation3 + $0x50] sm:$0xff]
          %v1199 = vld [vmem:[#allocation3 + $0x58] sm:$0xff]
          %v1200 = vld [vmem:[#allocation3 + $0x60] sm:$0xff]
          %v1201 = vld [vmem:[#allocation3 + $0x68] sm:$0xff]
          %v1202 = vld [vmem:[#allocation3 + $0x70] sm:$0xff]
          %v1203 = vld [vmem:[#allocation3 + $0x78] sm:$0xff]
          %v1204 = vld [vmem:[%s464] sm:$0xff]
          %v1205 = vld [vmem:[%s464 + $0x8] sm:$0xff]
          %v1207 = vsel %vm1167, %v1188, 0
          %v1210 = vsel %vm1167, %v1189, 0
          %v1213 = vsel %vm1167, %v1190, 0
          %v1216 = vsel %vm1167, %v1191, 0
          %v1219 = vsel %vm1167, %v1192, 0
          %v1222 = vsel %vm1167, %v1193, 0
          %v1225 = vsel %vm1167, %v1194, 0
          %v1228 = vsel %vm1167, %v1195, 0
          %v1231 = vsel %vm1167, %v1196, 0
          %v1234 = vsel %vm1167, %v1197, 0
          %v1237 = vsel %vm1167, %v1198, 0
          %v1240 = vsel %vm1167, %v1199, 0
          %v1243 = vsel %vm1167, %v1200, 0
          %v1246 = vsel %vm1167, %v1201, 0
          %v1249 = vsel %vm1167, %v1202, 0
          %v1252 = vsel %vm1167, %v1203, 0
          %1254 = vmatpush.msra.mxu0 0.0
          %1255 = vmatpush.msra.mxu0 0.0
          %1256 = vmatpush.msra.mxu0 0.0
          %1257 = vmatpush.msra.mxu0 0.0
          %1258 = vmatpush.msra.mxu0 0.0
          %1259 = vmatpush.msra.mxu0 0.0
          %1260 = vmatpush.msra.mxu0 0.0
          %1261 = vmatpush.msra.mxu0 0.0
          %1262 = vmatpush.msra.mxu0 0.0
          %1263 = vmatpush.msra.mxu0 0.0
          %1264 = vmatpush.msra.mxu0 0.0
          %1265 = vmatpush.msra.mxu0 0.0
          %1266 = vmatpush.msra.mxu0 0.0
          %1267 = vmatpush.msra.mxu0 0.0
          %1268 = vmatpush.msra.mxu0 0.0
          %1269 = vmatpush.msra.mxu0 %v1204
          %1270 = vmatmul.f32.gmra.mxu0 %v1207
          %v1271 = vpop.f32.mrf.mxu0
          %v1272 = vadd.f32 0.0, %v1271
          %1273 = vmatmul.f32.gmra.mxu0 %v1210
          %v1274 = vpop.f32.mrf.mxu0
          %v1275 = vadd.f32 0.0, %v1274
          %1276 = vmatmul.f32.gmra.mxu0 %v1213
          %v1277 = vpop.f32.mrf.mxu0
          %v1278 = vadd.f32 0.0, %v1277
          %1279 = vmatmul.f32.gmra.mxu0 %v1216
          %v1280 = vpop.f32.mrf.mxu0
          %v1281 = vadd.f32 0.0, %v1280
          %1282 = vmatmul.f32.gmra.mxu0 %v1219
          %v1283 = vpop.f32.mrf.mxu0
          %v1284 = vadd.f32 0.0, %v1283
          %1285 = vmatmul.f32.gmra.mxu0 %v1222
          %v1286 = vpop.f32.mrf.mxu0
          %v1287 = vadd.f32 0.0, %v1286
          %1288 = vmatmul.f32.gmra.mxu0 %v1225
          %v1289 = vpop.f32.mrf.mxu0
          %v1290 = vadd.f32 0.0, %v1289
          %1291 = vmatmul.f32.gmra.mxu0 %v1228
          %v1292 = vpop.f32.mrf.mxu0
          %v1293 = vadd.f32 0.0, %v1292
          %1294 = vmatmul.f32.gmra.mxu0 %v1231
          %v1295 = vpop.f32.mrf.mxu0
          %v1296 = vadd.f32 0.0, %v1295
          %1297 = vmatmul.f32.gmra.mxu0 %v1234
          %v1298 = vpop.f32.mrf.mxu0
          %v1299 = vadd.f32 0.0, %v1298
          %1300 = vmatmul.f32.gmra.mxu0 %v1237
          %v1301 = vpop.f32.mrf.mxu0
          %v1302 = vadd.f32 0.0, %v1301
          %1303 = vmatmul.f32.gmra.mxu0 %v1240
          %v1304 = vpop.f32.mrf.mxu0
          %v1305 = vadd.f32 0.0, %v1304
          %1306 = vmatmul.f32.gmra.mxu0 %v1243
          %v1307 = vpop.f32.mrf.mxu0
          %v1308 = vadd.f32 0.0, %v1307
          %1309 = vmatmul.f32.gmra.mxu0 %v1246
          %v1310 = vpop.f32.mrf.mxu0
          %v1311 = vadd.f32 0.0, %v1310
          %1312 = vmatmul.f32.gmra.mxu0 %v1249
          %v1313 = vpop.f32.mrf.mxu0
          %v1314 = vadd.f32 0.0, %v1313
          %1315 = vmatmul.f32.gmra.mxu0 %v1252
          %v1316 = vpop.f32.mrf.mxu0
          %v1317 = vadd.f32 0.0, %v1316
          %1318 = vdwg.mxu0
          %1319 = vmatpush.msra.mxu0 0.0
          %1320 = vmatpush.msra.mxu0 0.0
          %1321 = vmatpush.msra.mxu0 0.0
          %1322 = vmatpush.msra.mxu0 0.0
          %1323 = vmatpush.msra.mxu0 0.0
          %1324 = vmatpush.msra.mxu0 0.0
          %1325 = vmatpush.msra.mxu0 0.0
          %1326 = vmatpush.msra.mxu0 0.0
          %1327 = vmatpush.msra.mxu0 0.0
          %1328 = vmatpush.msra.mxu0 0.0
          %1329 = vmatpush.msra.mxu0 0.0
          %1330 = vmatpush.msra.mxu0 0.0
          %1331 = vmatpush.msra.mxu0 0.0
          %1332 = vmatpush.msra.mxu0 0.0
          %1333 = vmatpush.msra.mxu0 0.0
          %1334 = vmatpush.msra.mxu0 %v1205
          %1335 = vmatmul.f32.gmra.mxu0 %v1207
          %v1336 = vpop.f32.mrf.mxu0
          %v1337 = vadd.f32 0.0, %v1336
          %1338 = vmatmul.f32.gmra.mxu0 %v1210
          %v1339 = vpop.f32.mrf.mxu0
          %v1340 = vadd.f32 0.0, %v1339
          %1341 = vmatmul.f32.gmra.mxu0 %v1213
          %v1342 = vpop.f32.mrf.mxu0
          %v1343 = vadd.f32 0.0, %v1342
          %1344 = vmatmul.f32.gmra.mxu0 %v1216
          %v1345 = vpop.f32.mrf.mxu0
          %v1346 = vadd.f32 0.0, %v1345
          %1347 = vmatmul.f32.gmra.mxu0 %v1219
          %v1348 = vpop.f32.mrf.mxu0
          %v1349 = vadd.f32 0.0, %v1348
          %1350 = vmatmul.f32.gmra.mxu0 %v1222
          %v1351 = vpop.f32.mrf.mxu0
          %v1352 = vadd.f32 0.0, %v1351
          %1353 = vmatmul.f32.gmra.mxu0 %v1225
          %v1354 = vpop.f32.mrf.mxu0
          %v1355 = vadd.f32 0.0, %v1354
          %1356 = vmatmul.f32.gmra.mxu0 %v1228
          %v1357 = vpop.f32.mrf.mxu0
          %v1358 = vadd.f32 0.0, %v1357
          %1359 = vmatmul.f32.gmra.mxu0 %v1231
          %v1360 = vpop.f32.mrf.mxu0
          %v1361 = vadd.f32 0.0, %v1360
          %1362 = vmatmul.f32.gmra.mxu0 %v1234
          %v1363 = vpop.f32.mrf.mxu0
          %v1364 = vadd.f32 0.0, %v1363
          %1365 = vmatmul.f32.gmra.mxu0 %v1237
          %v1366 = vpop.f32.mrf.mxu0
          %v1367 = vadd.f32 0.0, %v1366
          %1368 = vmatmul.f32.gmra.mxu0 %v1240
          %v1369 = vpop.f32.mrf.mxu0
          %v1370 = vadd.f32 0.0, %v1369
          %1371 = vmatmul.f32.gmra.mxu0 %v1243
          %v1372 = vpop.f32.mrf.mxu0
          %v1373 = vadd.f32 0.0, %v1372
          %1374 = vmatmul.f32.gmra.mxu0 %v1246
          %v1375 = vpop.f32.mrf.mxu0
          %v1376 = vadd.f32 0.0, %v1375
          %1377 = vmatmul.f32.gmra.mxu0 %v1249
          %v1378 = vpop.f32.mrf.mxu0
          %v1379 = vadd.f32 0.0, %v1378
          %1380 = vmatmul.f32.gmra.mxu0 %v1252
          %v1381 = vpop.f32.mrf.mxu0
          %v1382 = vadd.f32 0.0, %v1381
          %1383 = vdwg.mxu0
          %v1384 = vld [vmem:[#allocation2] sm:$0xff]
          %v1385 = vld [vmem:[#allocation2 + $0x8] sm:$0xff]
          %v1386 = vld [vmem:[#allocation2 + $0x10] sm:$0xff]
          %v1387 = vld [vmem:[#allocation2 + $0x18] sm:$0xff]
          %v1388 = vld [vmem:[#allocation2 + $0x20] sm:$0xff]
          %v1389 = vld [vmem:[#allocation2 + $0x28] sm:$0xff]
          %v1390 = vld [vmem:[#allocation2 + $0x30] sm:$0xff]
          %v1391 = vld [vmem:[#allocation2 + $0x38] sm:$0xff]
          %v1392 = vld [vmem:[#allocation2 + $0x40] sm:$0xff]
          %v1393 = vld [vmem:[#allocation2 + $0x48] sm:$0xff]
          %v1394 = vld [vmem:[#allocation2 + $0x50] sm:$0xff]
          %v1395 = vld [vmem:[#allocation2 + $0x58] sm:$0xff]
          %v1396 = vld [vmem:[#allocation2 + $0x60] sm:$0xff]
          %v1397 = vld [vmem:[#allocation2 + $0x68] sm:$0xff]
          %v1398 = vld [vmem:[#allocation2 + $0x70] sm:$0xff]
          %v1399 = vld [vmem:[#allocation2 + $0x78] sm:$0xff]
          %v1400 = vld [vmem:[#allocation2 + $0x80] sm:$0xff]
          %v1401 = vld [vmem:[#allocation2 + $0x88] sm:$0xff]
          %v1402 = vld [vmem:[#allocation2 + $0x90] sm:$0xff]
          %v1403 = vld [vmem:[#allocation2 + $0x98] sm:$0xff]
          %v1404 = vld [vmem:[#allocation2 + $0xa0] sm:$0xff]
          %v1405 = vld [vmem:[#allocation2 + $0xa8] sm:$0xff]
          %v1406 = vld [vmem:[#allocation2 + $0xb0] sm:$0xff]
          %v1407 = vld [vmem:[#allocation2 + $0xb8] sm:$0xff]
          %v1408 = vld [vmem:[#allocation2 + $0xc0] sm:$0xff]
          %v1409 = vld [vmem:[#allocation2 + $0xc8] sm:$0xff]
          %v1410 = vld [vmem:[#allocation2 + $0xd0] sm:$0xff]
          %v1411 = vld [vmem:[#allocation2 + $0xd8] sm:$0xff]
          %v1412 = vld [vmem:[#allocation2 + $0xe0] sm:$0xff]
          %v1413 = vld [vmem:[#allocation2 + $0xe8] sm:$0xff]
          %v1414 = vld [vmem:[#allocation2 + $0xf0] sm:$0xff]
          %v1415 = vld [vmem:[#allocation2 + $0xf8] sm:$0xff]
          %v1416 = vld [vmem:[%s402] sm:$0x3]
          %v1418 = vperm.slane %v1416, 0
          %v1419 = vperm.slane %v1416, 1
          %v1422 = vadd.f32 %v1384, %v1418
          %v1423 = vadd.f32 %v1385, %v1419
          %v1424 = vadd.f32 %v1386, %v1418
          %v1425 = vadd.f32 %v1387, %v1419
          %v1426 = vadd.f32 %v1388, %v1418
          %v1427 = vadd.f32 %v1389, %v1419
          %v1428 = vadd.f32 %v1390, %v1418
          %v1429 = vadd.f32 %v1391, %v1419
          %v1430 = vadd.f32 %v1392, %v1418
          %v1431 = vadd.f32 %v1393, %v1419
          %v1432 = vadd.f32 %v1394, %v1418
          %v1433 = vadd.f32 %v1395, %v1419
          %v1434 = vadd.f32 %v1396, %v1418
          %v1435 = vadd.f32 %v1397, %v1419
          %v1436 = vadd.f32 %v1398, %v1418
          %v1437 = vadd.f32 %v1399, %v1419
          %v1438 = vadd.f32 %v1400, %v1418
          %v1439 = vadd.f32 %v1401, %v1419
          %v1440 = vadd.f32 %v1402, %v1418
          %v1441 = vadd.f32 %v1403, %v1419
          %v1442 = vadd.f32 %v1404, %v1418
          %v1443 = vadd.f32 %v1405, %v1419
          %v1444 = vadd.f32 %v1406, %v1418
          %v1445 = vadd.f32 %v1407, %v1419
          %v1446 = vadd.f32 %v1408, %v1418
          %v1447 = vadd.f32 %v1409, %v1419
          %v1448 = vadd.f32 %v1410, %v1418
          %v1449 = vadd.f32 %v1411, %v1419
          %v1450 = vadd.f32 %v1412, %v1418
          %v1451 = vadd.f32 %v1413, %v1419
          %v1452 = vadd.f32 %v1414, %v1418
          %v1453 = vadd.f32 %v1415, %v1419
          %v1454 = vadd.f32 %v1422, %v1272
          %v1455 = vadd.f32 %v1423, %v1337
          %v1456 = vadd.f32 %v1424, %v1275
          %v1457 = vadd.f32 %v1425, %v1340
          %v1458 = vadd.f32 %v1426, %v1278
          %v1459 = vadd.f32 %v1427, %v1343
          %v1460 = vadd.f32 %v1428, %v1281
          %v1461 = vadd.f32 %v1429, %v1346
          %v1462 = vadd.f32 %v1430, %v1284
          %v1463 = vadd.f32 %v1431, %v1349
          %v1464 = vadd.f32 %v1432, %v1287
          %v1465 = vadd.f32 %v1433, %v1352
          %v1466 = vadd.f32 %v1434, %v1290
          %v1467 = vadd.f32 %v1435, %v1355
          %v1468 = vadd.f32 %v1436, %v1293
          %v1469 = vadd.f32 %v1437, %v1358
          %v1470 = vadd.f32 %v1438, %v1296
          %v1471 = vadd.f32 %v1439, %v1361
          %v1472 = vadd.f32 %v1440, %v1299
          %v1473 = vadd.f32 %v1441, %v1364
          %v1474 = vadd.f32 %v1442, %v1302
          %v1475 = vadd.f32 %v1443, %v1367
          %v1476 = vadd.f32 %v1444, %v1305
          %v1477 = vadd.f32 %v1445, %v1370
          %v1478 = vadd.f32 %v1446, %v1308
          %v1479 = vadd.f32 %v1447, %v1373
          %v1480 = vadd.f32 %v1448, %v1311
          %v1481 = vadd.f32 %v1449, %v1376
          %v1482 = vadd.f32 %v1450, %v1314
          %v1483 = vadd.f32 %v1451, %v1379
          %v1484 = vadd.f32 %v1452, %v1317
          %v1485 = vadd.f32 %v1453, %v1382
          %1486 = vst [vmem:[%s448] sm:$0xff] %v1454
          %1487 = vst [vmem:[%s448 + $0x8] sm:$0xff] %v1455
          %1488 = vst [vmem:[%s448 + $0x10] sm:$0xff] %v1456
          %1489 = vst [vmem:[%s448 + $0x18] sm:$0xff] %v1457
          %1490 = vst [vmem:[%s448 + $0x20] sm:$0xff] %v1458
          %1491 = vst [vmem:[%s448 + $0x28] sm:$0xff] %v1459
          %1492 = vst [vmem:[%s448 + $0x30] sm:$0xff] %v1460
          %1493 = vst [vmem:[%s448 + $0x38] sm:$0xff] %v1461
          %1494 = vst [vmem:[%s448 + $0x40] sm:$0xff] %v1462
          %1495 = vst [vmem:[%s448 + $0x48] sm:$0xff] %v1463
          %1496 = vst [vmem:[%s448 + $0x50] sm:$0xff] %v1464
          %1497 = vst [vmem:[%s448 + $0x58] sm:$0xff] %v1465
          %1498 = vst [vmem:[%s448 + $0x60] sm:$0xff] %v1466
          %1499 = vst [vmem:[%s448 + $0x68] sm:$0xff] %v1467
          %1500 = vst [vmem:[%s448 + $0x70] sm:$0xff] %v1468
          %1501 = vst [vmem:[%s448 + $0x78] sm:$0xff] %v1469
          %1502 = vst [vmem:[%s448 + $0x80] sm:$0xff] %v1470
          %1503 = vst [vmem:[%s448 + $0x88] sm:$0xff] %v1471
          %1504 = vst [vmem:[%s448 + $0x90] sm:$0xff] %v1472
          %1505 = vst [vmem:[%s448 + $0x98] sm:$0xff] %v1473
          %1506 = vst [vmem:[%s448 + $0xa0] sm:$0xff] %v1474
          %1507 = vst [vmem:[%s448 + $0xa8] sm:$0xff] %v1475
          %1508 = vst [vmem:[%s448 + $0xb0] sm:$0xff] %v1476
          %1509 = vst [vmem:[%s448 + $0xb8] sm:$0xff] %v1477
          %1510 = vst [vmem:[%s448 + $0xc0] sm:$0xff] %v1478
          %1511 = vst [vmem:[%s448 + $0xc8] sm:$0xff] %v1479
          %1512 = vst [vmem:[%s448 + $0xd0] sm:$0xff] %v1480
          %1513 = vst [vmem:[%s448 + $0xd8] sm:$0xff] %v1481
          %1514 = vst [vmem:[%s448 + $0xe0] sm:$0xff] %v1482
          %1515 = vst [vmem:[%s448 + $0xe8] sm:$0xff] %v1483
          %1516 = vst [vmem:[%s448 + $0xf0] sm:$0xff] %v1484
          %1517 = vst [vmem:[%s448 + $0xf8] sm:$0xff] %v1485
        $region79: #{tpu_custom_call.1} parent=58 // pred_fallthru
          _
        %s1518 = sand.u32 %s188, 1
        %s1519 = scalar_lea.sflag [#allocation7], %s1518
        %s1520 = sand.u32 %s188, 1
        %s1521 = smul.addr %s1520, 256
        %s1522 = scalar_lea.vmem [#allocation10], %s1521
        // Predicated region
        $region80: #{tpu_custom_call.1} parent=58 // pred_check
          %p1523 = pneg %p198
        $region81: #{tpu_custom_call.1} parent=58 // pred_check_branch
          %1525 = sbr.rel (%p1523) target = $region83
        $region82: #{tpu_custom_call.1} parent=58 // pred_region
          %s1526 = smul.u32 16, %s30
          %s1527 = smul.u32 2, %s31
          %1529 = vsyncadd %s1519, 0
          %s1530 = smul.addr %s1526, 4
          %s1531 = sadd.s32 %s1527, %s1530
          %s1532 = smul.addr %s1531, 8
          %s1533 = scalar_lea.hbm %s5, %s1532
          %s1534 = sshll.u32 %s1522, 4
          %s1535 = int_to_ptr.vmem [resolvable:$true] %s1534
          %s1536 = sshll.u32 %s1533, 4
          %s1537 = int_to_ptr.hbm [resolvable:$true] %s1536
          %1542 = dma.vmem_to_hbm [thread:$0]  %s1535, 4096, %s1537, %s1519, 256, 512, 16
        $region83: #{tpu_custom_call.1} parent=58 // pred_fallthru
          _
      $region59: #{tpu_custom_call.1} parent=5 // pred_fallthru
        _
      %p1543 = scmp.le.s32.totalorder 2, %s20
      // Predicated region
      $region84: #{tpu_custom_call.1} parent=5 // pred_check
        %p1544 = pneg %p1543
      $region85: #{tpu_custom_call.1} parent=5 // pred_check_branch
        %1546 = sbr.rel (%p1544) target = $region87
      $region86: #{tpu_custom_call.1} parent=5 // pred_region
        %s1547 = ssub.s32 %s20, 2
        // Predicated region
        $region88: #{tpu_custom_call.1} parent=86 // pred_check
          %p1548 = pneg %p204
        $region89: #{tpu_custom_call.1} parent=86 // pred_check_branch
          %1550 = sbr.rel (%p1548) target = $region91
        $region90: #{tpu_custom_call.1} parent=86 // pred_region
          %s1551 = sand.u32 %s189, 1
          %s1552 = scalar_lea.sflag [#allocation7], %s1551
          %s1553 = sand.u32 %s189, 1
          %s1554 = smul.addr %s1553, 256
          %s1555 = scalar_lea.vmem [#allocation10], %s1554
          %1557 = dma.done %s1552, 4096
        $region91: #{tpu_custom_call.1} parent=86 // pred_fallthru
          _
      $region87: #{tpu_custom_call.1} parent=5 // pred_fallthru
        _
    $region6: #{tpu_custom_call.1} parent=1 // loop_footer
      %s24 = sadd.s32 1, %s20
    $region7: #{tpu_custom_call.1} parent=1 // loop_footer_branch
      %19 = sbr.rel target = $region3
    $region8: #{tpu_custom_call.1} parent=1 // loop_exit
      _
    %1558 = vsyncpa [#allocation6], 1
    %s1559 = scalar_lea.sflag [#allocation6], 1
    %1560 = vsyncpa %s1559, 1
    %1561 = vsyncpa [#allocation9], 1
    %s1562 = scalar_lea.sflag [#allocation9], 1
    %1563 = vsyncpa %s1562, 1
    %1564 = vsyncpa [#allocation7], 1
    %s1565 = scalar_lea.sflag [#allocation7], 1
    %1566 = vsyncpa %s1565, 1

</llo_original>
